<compile_context>
chip_gen: v5e
topology: v5e:2x2
jax: 0.10.0
libtpu: 0.0.40
codegen_flags: <defaults>
</compile_context>

<pallas_src>
import functools
import math

import jax
import jax.numpy as jnp
from jax.experimental import pallas as pl
from jax.experimental.pallas import tpu as pltpu

HIDDEN = 256
LANE = 128
MXU_M = 256          # MXU M-dim on v6e/v7x (v5e only needs multiples of 128)
MAX_TILE_B = 1024    # cap per-step tile (keeps double-buffered VMEM tiny)

# Lazily resolved (fused_concat, single_buffer_weights) variant that lowers
# cleanly on this JAX/libtpu build.  The preferred variant is (True, True).
_KERNEL_VARIANT = None


def _round_up(x, m):
    return ((x + m - 1) // m) * m


def _pick_tile_b(B):
    """Batch-tile heuristic from the perf review.

    * B <= 256: single full-B tile (block dim == array dim is always legal).
    * Otherwise: multiple of 256 (fills MXU rows on v6e/v7x), capped at 1024,
      chosen so the grid has >= 2 steps (v7x megacore split) when B allows.
    """
    if B <= MXU_M:
        return B
    half = B // 2
    tile_b = max(MXU_M, (half // MXU_M) * MXU_M)
    return min(tile_b, MAX_TILE_B)


def _actor_kernel(state_ref, goal_ref,
                  w1_ref, b1_ref,
                  w2_ref, b2_ref,
                  w3_ref, b3_ref,
                  w4_ref, b4_ref,
                  out_ref, *, max_action, action_dim, state_dim, fused_concat):
    """4-layer MLP for one batch tile, fully VMEM-resident.

    bf16 MXU inputs, f32 accumulation, f32 bias/ReLU/tanh epilogues.
    Layer 1 fuses torch.cat([state, goal]) either as an in-kernel lane concat
    feeding one dot (preferred) or as two dots against slices of W1.
    """
    if fused_concat:
        # Lane concat is cheap (both operands live in a single vreg row).
        x = jnp.concatenate([state_ref[...], goal_ref[...]], axis=-1)
        h = jnp.dot(x, w1_ref[...], preferred_element_type=jnp.float32)
    else:
        h = (jnp.dot(state_ref[...], w1_ref[:state_dim, :],
                     preferred_element_type=jnp.float32)
             + jnp.dot(goal_ref[...], w1_ref[state_dim:, :],
                       preferred_element_type=jnp.float32))
    h = jnp.maximum(h + b1_ref[...], 0.0)

    h = jnp.dot(h.astype(jnp.bfloat16), w2_ref[...],
                preferred_element_type=jnp.float32) + b2_ref[...]
    h = jnp.maximum(h, 0.0)

    h = jnp.dot(h.astype(jnp.bfloat16), w3_ref[...],
                preferred_element_type=jnp.float32) + b3_ref[...]
    h = jnp.maximum(h, 0.0)

    a = jnp.dot(h.astype(jnp.bfloat16), w4_ref[...],
                preferred_element_type=jnp.float32) + b4_ref[...]
    # Narrow store: only the real action columns go back to HBM (no 32x f32
    # write amplification, no wrapper-side slice pass).
    out_ref[...] = (max_action * jnp.tanh(a[:, :action_dim])).astype(out_ref.dtype)


def actor_forward(state, goal, params, max_action, action_dim):
    """Pallas-call wrapper; returns (B, action_dim) f32 actions."""
    global _KERNEL_VARIANT

    B, state_dim = state.shape
    goal_dim = goal.shape[1]
    hidden = params["w2"].shape[0]
    out_pad = params["w4"].shape[1]      # lane-padded weight columns

    # Inputs travel HBM->VMEM as bf16 (half the DMA bytes; MXU-native).
    state = state.astype(jnp.bfloat16)
    goal = goal.astype(jnp.bfloat16)

    tile_b = _pick_tile_b(B)
    grid = (pl.cdiv(B, tile_b),)

    weights = (params["w1"], params["b1"], params["w2"], params["b2"],
               params["w3"], params["b3"], params["w4"], params["b4"])
    operands = (state, goal) + weights

    flops = 2 * B * ((state_dim + goal_dim) * hidden
                     + 2 * hidden * hidden
                     + hidden * out_pad)
    bytes_accessed = (
        int(state.size) * state.dtype.itemsize
        + int(goal.size) * goal.dtype.itemsize
        + sum(int(p.size) * p.dtype.itemsize for p in weights)
        + B * action_dim * 4)
    cost = pl.CostEstimate(flops=flops,
                           transcendentals=B * action_dim,
                           bytes_accessed=bytes_accessed)

    def build(fused_concat, single_buffer_weights):
        kernel = functools.partial(
            _actor_kernel, max_action=float(max_action),
            action_dim=action_dim, state_dim=state_dim,
            fused_concat=fused_concat)

        # Activation tiles march along the batch; weights/biases are pinned to
        # block (0, 0) for every grid step (VMEM-resident, fetched once).
        act_specs = [
            pl.BlockSpec((tile_b, state_dim), lambda i: (i, 0)),
            pl.BlockSpec((tile_b, goal_dim), lambda i: (i, 0)),
        ]
        if single_buffer_weights:
            # Constant-index blocks don't need double-buffering.
            w_specs = [pl.BlockSpec(w.shape, lambda i: (0, 0),
                                    pipeline_mode=pl.Buffered(1))
                       for w in weights]
        else:
            w_specs = [pl.BlockSpec(w.shape, lambda i: (0, 0)) for w in weights]

        return pl.pallas_call(
            kernel,
            out_shape=jax.ShapeDtypeStruct((B, action_dim), jnp.float32),
            grid=grid,
            in_specs=act_specs + w_specs,
            out_specs=pl.BlockSpec((tile_b, action_dim), lambda i: (i, 0)),
            compiler_params=pltpu.CompilerParams(
                dimension_semantics=("parallel",),
                # Explicit headroom (v5e scoped default is 16 MiB); raise
                # further if tile_b is ever scaled to >= 2048 rows.
                vmem_limit_bytes=32 * 1024 * 1024),
            cost_estimate=cost,
        )

    if _KERNEL_VARIANT is not None:
        return build(*_KERNEL_VARIANT)(*operands)

    # Portability fallbacks: prefer fused layer-1 concat + single-buffered
    # weights; degrade gracefully if this build rejects either feature.
    last_err = None
    for variant in ((True, True), (True, False), (False, False)):
        try:
            out = build(*variant)(*operands)
            _KERNEL_VARIANT = variant
            return out
        except Exception as e:   # lowering / API rejection -> try next variant
            last_err = e
    raise last_err


def init_actor_params(key, state_dim, goal_dim, action_dim, hidden=HIDDEN):
    """PyTorch nn.Linear-style init (uniform +-1/sqrt(fan_in)).

    Weights stored transposed, (in_features, out_features), in bf16.  W4/b4
    are zero-padded to a lane-dense 128-wide matmul; biases stay f32 (added
    post-accumulation).
    """
    input_dim = state_dim + goal_dim
    out_pad = _round_up(action_dim, LANE)
    dims = [(input_dim, hidden), (hidden, hidden), (hidden, hidden),
            (hidden, action_dim)]

    raw = {}
    for i, (fan_in, fan_out) in enumerate(dims, start=1):
        key, kw, kb = jax.random.split(key, 3)
        bound = 1.0 / math.sqrt(fan_in)
        raw[f"w{i}"] = jax.random.uniform(
            kw, (fan_in, fan_out), minval=-bound, maxval=bound,
            dtype=jnp.float32)
        raw[f"b{i}"] = jax.random.uniform(
            kb, (1, fan_out), minval=-bound, maxval=bound,
            dtype=jnp.float32)

    w4_pad = jnp.zeros((hidden, out_pad), jnp.bfloat16)
    w4_pad = w4_pad.at[:, :action_dim].set(raw["w4"].astype(jnp.bfloat16))
    b4_pad = jnp.zeros((1, out_pad), jnp.float32)
    b4_pad = b4_pad.at[:, :action_dim].set(raw["b4"])

    return {
        "w1": raw["w1"].astype(jnp.bfloat16),
        "b1": raw["b1"],
        "w2": raw["w2"].astype(jnp.bfloat16),
        "b2": raw["b2"],
        "w3": raw["w3"].astype(jnp.bfloat16),
        "b3": raw["b3"],
        "w4": w4_pad,
        "b4": b4_pad,
    }


def actor_reference(state, goal, params, max_action, action_dim):
    """Pure-JAX reference following the same bf16-in / f32-accumulate math."""
    x = jnp.concatenate([state, goal], axis=1).astype(jnp.bfloat16)
    h = jnp.maximum(
        jnp.dot(x, params["w1"], preferred_element_type=jnp.float32)
        + params["b1"], 0.0)
    h = jnp.maximum(
        jnp.dot(h.astype(jnp.bfloat16), params["w2"],
                preferred_element_type=jnp.float32) + params["b2"], 0.0)
    h = jnp.maximum(
        jnp.dot(h.astype(jnp.bfloat16), params["w3"],
                preferred_element_type=jnp.float32) + params["b3"], 0.0)
    a = jnp.dot(h.astype(jnp.bfloat16), params["w4"],
                preferred_element_type=jnp.float32) + params["b4"]
    return (max_action * jnp.tanh(a))[:, :action_dim]


if __name__ == "__main__":
    # Shapes consistent with the module: state_dim=16, goal_dim=8,
    # action_dim=4, max_action=2.0.  Check both the tiny-batch (single-tile,
    # latency-bound) path and the tiled multi-step-grid path.
    state_dim, goal_dim, action_dim = 16, 8, 4
    max_action = 2.0

    key = jax.random.PRNGKey(0)
    key, kp = jax.random.split(key)
    params = init_actor_params(kp, state_dim, goal_dim, action_dim)

    for batch in (2, 512):
        key, ks, kg = jax.random.split(key, 3)
        state = jax.random.normal(ks, (batch, state_dim), dtype=jnp.float32)
        goal = jax.random.normal(kg, (batch, goal_dim), dtype=jnp.float32)

        out = jax.block_until_ready(
            actor_forward(state, goal, params, max_action, action_dim))
        ref = actor_reference(state, goal, params, max_action, action_dim)

        assert out.shape == (batch, action_dim)
        assert jnp.allclose(out, ref, atol=2e-3, rtol=2e-3), (
            f"mismatch vs reference at batch={batch}")

    print("KERNEL_OK")
</pallas_src>

<mosaic_0001>
module attributes {stable_mosaic.version = 11 : i64} {
  func.func @_actor_kernel(%arg0: i32, %arg1: memref<2x16xbf16, #tpu.memory_space<vmem>>, %arg2: memref<2x8xbf16, #tpu.memory_space<vmem>>, %arg3: memref<24x256xbf16, #tpu.memory_space<vmem>>, %arg4: memref<1x256xf32, #tpu.memory_space<vmem>>, %arg5: memref<256x256xbf16, #tpu.memory_space<vmem>>, %arg6: memref<1x256xf32, #tpu.memory_space<vmem>>, %arg7: memref<256x256xbf16, #tpu.memory_space<vmem>>, %arg8: memref<1x256xf32, #tpu.memory_space<vmem>>, %arg9: memref<256x128xbf16, #tpu.memory_space<vmem>>, %arg10: memref<1x128xf32, #tpu.memory_space<vmem>>, %arg11: memref<2x4xf32, #tpu.memory_space<vmem>>) attributes {dimension_semantics = [#tpu.dimension_semantics<parallel>], iteration_bounds = array<i64: 1>, scalar_prefetch = 0 : i64, scratch_operands = 0 : i64, tpu.core_type = #tpu.core_type<tc>, window_params = [{transform_indices = @transform_0, window_bounds = array<i64: 2, 16>}, {transform_indices = @transform_1, window_bounds = array<i64: 2, 8>}, {pipeline_mode = #tpu.pipeline_mode<synchronous>, transform_indices = @transform_2, window_bounds = array<i64: 24, 256>}, {pipeline_mode = #tpu.pipeline_mode<synchronous>, transform_indices = @transform_3, window_bounds = array<i64: 1, 256>}, {pipeline_mode = #tpu.pipeline_mode<synchronous>, transform_indices = @transform_4, window_bounds = array<i64: 256, 256>}, {pipeline_mode = #tpu.pipeline_mode<synchronous>, transform_indices = @transform_5, window_bounds = array<i64: 1, 256>}, {pipeline_mode = #tpu.pipeline_mode<synchronous>, transform_indices = @transform_6, window_bounds = array<i64: 256, 256>}, {pipeline_mode = #tpu.pipeline_mode<synchronous>, transform_indices = @transform_7, window_bounds = array<i64: 1, 256>}, {pipeline_mode = #tpu.pipeline_mode<synchronous>, transform_indices = @transform_8, window_bounds = array<i64: 256, 128>}, {pipeline_mode = #tpu.pipeline_mode<synchronous>, transform_indices = @transform_9, window_bounds = array<i64: 1, 128>}, {transform_indices = @transform_10, window_bounds = array<i64: 2, 4>}]} {
    %c0 = arith.constant 0 : index
    %c0_0 = arith.constant 0 : index
    %0 = vector.load %arg1[%c0, %c0_0] : memref<2x16xbf16, #tpu.memory_space<vmem>>, vector<2x16xbf16>
    %c0_1 = arith.constant 0 : index
    %c0_2 = arith.constant 0 : index
    %1 = vector.load %arg2[%c0_1, %c0_2] : memref<2x8xbf16, #tpu.memory_space<vmem>>, vector<2x8xbf16>
    %2 = tpu.concatenate %0, %1 in 1 : vector<2x16xbf16>, vector<2x8xbf16> -> vector<2x24xbf16>
    %c0_3 = arith.constant 0 : index
    %c0_4 = arith.constant 0 : index
    %3 = vector.load %arg3[%c0_3, %c0_4] : memref<24x256xbf16, #tpu.memory_space<vmem>>, vector<24x256xbf16>
    %cst = arith.constant dense<0.000000e+00> : vector<2x256xf32>
    %4 = tpu.matmul %2, %3, %cst {dimension_numbers = #tpu.dot_dimension_numbers<[1], [0], [0], [1], [0, 0, 1, 1], [], []>} : vector<2x24xbf16>, vector<24x256xbf16>, vector<2x256xf32> -> vector<2x256xf32>
    %c0_5 = arith.constant 0 : index
    %c0_6 = arith.constant 0 : index
    %5 = vector.load %arg4[%c0_5, %c0_6] : memref<1x256xf32, #tpu.memory_space<vmem>>, vector<1x256xf32>
    %6 = vector.broadcast %5 : vector<1x256xf32> to vector<2x256xf32>
    %7 = arith.addf %4, %6 : vector<2x256xf32>
    %cst_7 = arith.constant 0.000000e+00 : f32
    %8 = vector.broadcast %cst_7 : f32 to vector<2x256xf32>
    %9 = arith.maximumf %7, %8 : vector<2x256xf32>
    %10 = arith.truncf %9 : vector<2x256xf32> to vector<2x256xbf16>
    %c0_8 = arith.constant 0 : index
    %c0_9 = arith.constant 0 : index
    %11 = vector.load %arg5[%c0_8, %c0_9] : memref<256x256xbf16, #tpu.memory_space<vmem>>, vector<256x256xbf16>
    %cst_10 = arith.constant dense<0.000000e+00> : vector<2x256xf32>
    %12 = tpu.matmul %10, %11, %cst_10 {dimension_numbers = #tpu.dot_dimension_numbers<[1], [0], [0], [1], [0, 0, 1, 1], [], []>} : vector<2x256xbf16>, vector<256x256xbf16>, vector<2x256xf32> -> vector<2x256xf32>
    %c0_11 = arith.constant 0 : index
    %c0_12 = arith.constant 0 : index
    %13 = vector.load %arg6[%c0_11, %c0_12] : memref<1x256xf32, #tpu.memory_space<vmem>>, vector<1x256xf32>
    %14 = vector.broadcast %13 : vector<1x256xf32> to vector<2x256xf32>
    %15 = arith.addf %12, %14 : vector<2x256xf32>
    %cst_13 = arith.constant 0.000000e+00 : f32
    %16 = vector.broadcast %cst_13 : f32 to vector<2x256xf32>
    %17 = arith.maximumf %15, %16 : vector<2x256xf32>
    %18 = arith.truncf %17 : vector<2x256xf32> to vector<2x256xbf16>
    %c0_14 = arith.constant 0 : index
    %c0_15 = arith.constant 0 : index
    %19 = vector.load %arg7[%c0_14, %c0_15] : memref<256x256xbf16, #tpu.memory_space<vmem>>, vector<256x256xbf16>
    %cst_16 = arith.constant dense<0.000000e+00> : vector<2x256xf32>
    %20 = tpu.matmul %18, %19, %cst_16 {dimension_numbers = #tpu.dot_dimension_numbers<[1], [0], [0], [1], [0, 0, 1, 1], [], []>} : vector<2x256xbf16>, vector<256x256xbf16>, vector<2x256xf32> -> vector<2x256xf32>
    %c0_17 = arith.constant 0 : index
    %c0_18 = arith.constant 0 : index
    %21 = vector.load %arg8[%c0_17, %c0_18] : memref<1x256xf32, #tpu.memory_space<vmem>>, vector<1x256xf32>
    %22 = vector.broadcast %21 : vector<1x256xf32> to vector<2x256xf32>
    %23 = arith.addf %20, %22 : vector<2x256xf32>
    %cst_19 = arith.constant 0.000000e+00 : f32
    %24 = vector.broadcast %cst_19 : f32 to vector<2x256xf32>
    %25 = arith.maximumf %23, %24 : vector<2x256xf32>
    %26 = arith.truncf %25 : vector<2x256xf32> to vector<2x256xbf16>
    %c0_20 = arith.constant 0 : index
    %c0_21 = arith.constant 0 : index
    %27 = vector.load %arg9[%c0_20, %c0_21] : memref<256x128xbf16, #tpu.memory_space<vmem>>, vector<256x128xbf16>
    %cst_22 = arith.constant dense<0.000000e+00> : vector<2x128xf32>
    %28 = tpu.matmul %26, %27, %cst_22 {dimension_numbers = #tpu.dot_dimension_numbers<[1], [0], [0], [1], [0, 0, 1, 1], [], []>} : vector<2x256xbf16>, vector<256x128xbf16>, vector<2x128xf32> -> vector<2x128xf32>
    %c0_23 = arith.constant 0 : index
    %c0_24 = arith.constant 0 : index
    %29 = vector.load %arg10[%c0_23, %c0_24] : memref<1x128xf32, #tpu.memory_space<vmem>>, vector<1x128xf32>
    %30 = vector.broadcast %29 : vector<1x128xf32> to vector<2x128xf32>
    %31 = arith.addf %28, %30 : vector<2x128xf32>
    %32 = vector.extract_strided_slice %31 {offsets = [0, 0], sizes = [2, 4], strides = [1, 1]} : vector<2x128xf32> to vector<2x4xf32>
    %33 = math.tanh %32 : vector<2x4xf32>
    %cst_25 = arith.constant 2.000000e+00 : f32
    %34 = vector.broadcast %cst_25 : f32 to vector<2x4xf32>
    %35 = arith.mulf %34, %33 : vector<2x4xf32>
    %c0_26 = arith.constant 0 : index
    %c0_27 = arith.constant 0 : index
    %36 = vector.load %arg11[%c0_26, %c0_27] : memref<2x4xf32, #tpu.memory_space<vmem>>, vector<2x4xf32>
    tpu.vector_store %arg11[%c0_26, %c0_27], %35 {strides = array<i32>} : memref<2x4xf32, #tpu.memory_space<vmem>>, vector<2x4xf32>,
    return
  }
  func.func @transform_0(%arg0: i32) -> (i32, i32) {
    %c0_i32 = arith.constant 0 : i32
    %c0_i32_0 = arith.constant 0 : i32
    return %arg0, %c0_i32 : i32, i32
  }
  func.func @transform_1(%arg0: i32) -> (i32, i32) {
    %c0_i32 = arith.constant 0 : i32
    %c0_i32_0 = arith.constant 0 : i32
    return %arg0, %c0_i32 : i32, i32
  }
  func.func @transform_2(%arg0: i32) -> (i32, i32) {
    %c0_i32 = arith.constant 0 : i32
    %c0_i32_0 = arith.constant 0 : i32
    %c0_i32_1 = arith.constant 0 : i32
    return %c0_i32, %c0_i32_0 : i32, i32
  }
  func.func @transform_3(%arg0: i32) -> (i32, i32) {
    %c0_i32 = arith.constant 0 : i32
    %c0_i32_0 = arith.constant 0 : i32
    %c0_i32_1 = arith.constant 0 : i32
    return %c0_i32, %c0_i32_0 : i32, i32
  }
  func.func @transform_4(%arg0: i32) -> (i32, i32) {
    %c0_i32 = arith.constant 0 : i32
    %c0_i32_0 = arith.constant 0 : i32
    %c0_i32_1 = arith.constant 0 : i32
    return %c0_i32, %c0_i32_0 : i32, i32
  }
  func.func @transform_5(%arg0: i32) -> (i32, i32) {
    %c0_i32 = arith.constant 0 : i32
    %c0_i32_0 = arith.constant 0 : i32
    %c0_i32_1 = arith.constant 0 : i32
    return %c0_i32, %c0_i32_0 : i32, i32
  }
  func.func @transform_6(%arg0: i32) -> (i32, i32) {
    %c0_i32 = arith.constant 0 : i32
    %c0_i32_0 = arith.constant 0 : i32
    %c0_i32_1 = arith.constant 0 : i32
    return %c0_i32, %c0_i32_0 : i32, i32
  }
  func.func @transform_7(%arg0: i32) -> (i32, i32) {
    %c0_i32 = arith.constant 0 : i32
    %c0_i32_0 = arith.constant 0 : i32
    %c0_i32_1 = arith.constant 0 : i32
    return %c0_i32, %c0_i32_0 : i32, i32
  }
  func.func @transform_8(%arg0: i32) -> (i32, i32) {
    %c0_i32 = arith.constant 0 : i32
    %c0_i32_0 = arith.constant 0 : i32
    %c0_i32_1 = arith.constant 0 : i32
    return %c0_i32, %c0_i32_0 : i32, i32
  }
  func.func @transform_9(%arg0: i32) -> (i32, i32) {
    %c0_i32 = arith.constant 0 : i32
    %c0_i32_0 = arith.constant 0 : i32
    %c0_i32_1 = arith.constant 0 : i32
    return %c0_i32, %c0_i32_0 : i32, i32
  }
  func.func @transform_10(%arg0: i32) -> (i32, i32) {
    %c0_i32 = arith.constant 0 : i32
    %c0_i32_0 = arith.constant 0 : i32
    return %arg0, %c0_i32 : i32, i32
  }
}

module attributes {stable_mosaic.version = 11 : i64} {
  func.func @_actor_kernel(%arg0: i32, %arg1: memref<2x16xbf16, #tpu.memory_space<vmem>>, %arg2: memref<2x8xbf16, #tpu.memory_space<vmem>>, %arg3: memref<24x256xbf16, #tpu.memory_space<vmem>>, %arg4: memref<1x256xf32, #tpu.memory_space<vmem>>, %arg5: memref<256x256xbf16, #tpu.memory_space<vmem>>, %arg6: memref<1x256xf32, #tpu.memory_space<vmem>>, %arg7: memref<256x256xbf16, #tpu.memory_space<vmem>>, %arg8: memref<1x256xf32, #tpu.memory_space<vmem>>, %arg9: memref<256x128xbf16, #tpu.memory_space<vmem>>, %arg10: memref<1x128xf32, #tpu.memory_space<vmem>>, %arg11: memref<2x4xf32, #tpu.memory_space<vmem>>) attributes {dimension_semantics = [#tpu.dimension_semantics<parallel>], iteration_bounds = array<i64: 1>, scalar_prefetch = 0 : i64, scratch_operands = 0 : i64, tpu.core_type = #tpu.core_type<tc>, window_params = [{transform_indices = @transform_0, window_bounds = array<i64: 2, 16>}, {transform_indices = @transform_1, window_bounds = array<i64: 2, 8>}, {pipeline_mode = #tpu.pipeline_mode<synchronous>, transform_indices = @transform_2, window_bounds = array<i64: 24, 256>}, {pipeline_mode = #tpu.pipeline_mode<synchronous>, transform_indices = @transform_3, window_bounds = array<i64: 1, 256>}, {pipeline_mode = #tpu.pipeline_mode<synchronous>, transform_indices = @transform_4, window_bounds = array<i64: 256, 256>}, {pipeline_mode = #tpu.pipeline_mode<synchronous>, transform_indices = @transform_5, window_bounds = array<i64: 1, 256>}, {pipeline_mode = #tpu.pipeline_mode<synchronous>, transform_indices = @transform_6, window_bounds = array<i64: 256, 256>}, {pipeline_mode = #tpu.pipeline_mode<synchronous>, transform_indices = @transform_7, window_bounds = array<i64: 1, 256>}, {pipeline_mode = #tpu.pipeline_mode<synchronous>, transform_indices = @transform_8, window_bounds = array<i64: 256, 128>}, {pipeline_mode = #tpu.pipeline_mode<synchronous>, transform_indices = @transform_9, window_bounds = array<i64: 1, 128>}, {transform_indices = @transform_10, window_bounds = array<i64: 2, 4>}]} {
    %c0 = arith.constant 0 : index
    %c0_0 = arith.constant 0 : index
    %0 = vector.load %arg1[%c0, %c0_0] : memref<2x16xbf16, #tpu.memory_space<vmem>>, vector<2x16xbf16>
    %c0_1 = arith.constant 0 : index
    %c0_2 = arith.constant 0 : index
    %1 = vector.load %arg2[%c0_1, %c0_2] : memref<2x8xbf16, #tpu.memory_space<vmem>>, vector<2x8xbf16>
    %2 = tpu.concatenate %0, %1 in 1 : vector<2x16xbf16>, vector<2x8xbf16> -> vector<2x24xbf16>
    %c0_3 = arith.constant 0 : index
    %c0_4 = arith.constant 0 : index
    %3 = vector.load %arg3[%c0_3, %c0_4] : memref<24x256xbf16, #tpu.memory_space<vmem>>, vector<24x256xbf16>
    %cst = arith.constant dense<0.000000e+00> : vector<2x256xf32>
    %4 = tpu.matmul %2, %3, %cst {dimension_numbers = #tpu.dot_dimension_numbers<[1], [0], [0], [1], [0, 0, 1, 1], [], []>} : vector<2x24xbf16>, vector<24x256xbf16>, vector<2x256xf32> -> vector<2x256xf32>
    %c0_5 = arith.constant 0 : index
    %c0_6 = arith.constant 0 : index
    %5 = vector.load %arg4[%c0_5, %c0_6] : memref<1x256xf32, #tpu.memory_space<vmem>>, vector<1x256xf32>
    %6 = vector.broadcast %5 : vector<1x256xf32> to vector<2x256xf32>
    %7 = arith.addf %4, %6 : vector<2x256xf32>
    %cst_7 = arith.constant 0.000000e+00 : f32
    %8 = vector.broadcast %cst_7 : f32 to vector<2x256xf32>
    %9 = arith.maximumf %7, %8 : vector<2x256xf32>
    %10 = arith.truncf %9 : vector<2x256xf32> to vector<2x256xbf16>
    %c0_8 = arith.constant 0 : index
    %c0_9 = arith.constant 0 : index
    %11 = vector.load %arg5[%c0_8, %c0_9] : memref<256x256xbf16, #tpu.memory_space<vmem>>, vector<256x256xbf16>
    %cst_10 = arith.constant dense<0.000000e+00> : vector<2x256xf32>
    %12 = tpu.matmul %10, %11, %cst_10 {dimension_numbers = #tpu.dot_dimension_numbers<[1], [0], [0], [1], [0, 0, 1, 1], [], []>} : vector<2x256xbf16>, vector<256x256xbf16>, vector<2x256xf32> -> vector<2x256xf32>
    %c0_11 = arith.constant 0 : index
    %c0_12 = arith.constant 0 : index
    %13 = vector.load %arg6[%c0_11, %c0_12] : memref<1x256xf32, #tpu.memory_space<vmem>>, vector<1x256xf32>
    %14 = vector.broadcast %13 : vector<1x256xf32> to vector<2x256xf32>
    %15 = arith.addf %12, %14 : vector<2x256xf32>
    %cst_13 = arith.constant 0.000000e+00 : f32
    %16 = vector.broadcast %cst_13 : f32 to vector<2x256xf32>
    %17 = arith.maximumf %15, %16 : vector<2x256xf32>
    %18 = arith.truncf %17 : vector<2x256xf32> to vector<2x256xbf16>
    %c0_14 = arith.constant 0 : index
    %c0_15 = arith.constant 0 : index
    %19 = vector.load %arg7[%c0_14, %c0_15] : memref<256x256xbf16, #tpu.memory_space<vmem>>, vector<256x256xbf16>
    %cst_16 = arith.constant dense<0.000000e+00> : vector<2x256xf32>
    %20 = tpu.matmul %18, %19, %cst_16 {dimension_numbers = #tpu.dot_dimension_numbers<[1], [0], [0], [1], [0, 0, 1, 1], [], []>} : vector<2x256xbf16>, vector<256x256xbf16>, vector<2x256xf32> -> vector<2x256xf32>
    %c0_17 = arith.constant 0 : index
    %c0_18 = arith.constant 0 : index
    %21 = vector.load %arg8[%c0_17, %c0_18] : memref<1x256xf32, #tpu.memory_space<vmem>>, vector<1x256xf32>
    %22 = vector.broadcast %21 : vector<1x256xf32> to vector<2x256xf32>
    %23 = arith.addf %20, %22 : vector<2x256xf32>
    %cst_19 = arith.constant 0.000000e+00 : f32
    %24 = vector.broadcast %cst_19 : f32 to vector<2x256xf32>
    %25 = arith.maximumf %23, %24 : vector<2x256xf32>
    %26 = arith.truncf %25 : vector<2x256xf32> to vector<2x256xbf16>
    %c0_20 = arith.constant 0 : index
    %c0_21 = arith.constant 0 : index
    %27 = vector.load %arg9[%c0_20, %c0_21] : memref<256x128xbf16, #tpu.memory_space<vmem>>, vector<256x128xbf16>
    %cst_22 = arith.constant dense<0.000000e+00> : vector<2x128xf32>
    %28 = tpu.matmul %26, %27, %cst_22 {dimension_numbers = #tpu.dot_dimension_numbers<[1], [0], [0], [1], [0, 0, 1, 1], [], []>} : vector<2x256xbf16>, vector<256x128xbf16>, vector<2x128xf32> -> vector<2x128xf32>
    %c0_23 = arith.constant 0 : index
    %c0_24 = arith.constant 0 : index
    %29 = vector.load %arg10[%c0_23, %c0_24] : memref<1x128xf32, #tpu.memory_space<vmem>>, vector<1x128xf32>
    %30 = vector.broadcast %29 : vector<1x128xf32> to vector<2x128xf32>
    %31 = arith.addf %28, %30 : vector<2x128xf32>
    %32 = vector.extract_strided_slice %31 {offsets = [0, 0], sizes = [2, 4], strides = [1, 1]} : vector<2x128xf32> to vector<2x4xf32>
    %33 = math.tanh %32 : vector<2x4xf32>
    %cst_25 = arith.constant 2.000000e+00 : f32
    %34 = vector.broadcast %cst_25 : f32 to vector<2x4xf32>
    %35 = arith.mulf %34, %33 : vector<2x4xf32>
    %c0_26 = arith.constant 0 : index
    %c0_27 = arith.constant 0 : index
    %36 = vector.load %arg11[%c0_26, %c0_27] : memref<2x4xf32, #tpu.memory_space<vmem>>, vector<2x4xf32>
    tpu.vector_store %arg11[%c0_26, %c0_27], %35 {strides = array<i32>} : memref<2x4xf32, #tpu.memory_space<vmem>>, vector<2x4xf32>,
    return
  }
  func.func @transform_0(%arg0: i32) -> (i32, i32) {
    %c0_i32 = arith.constant 0 : i32
    %c0_i32_0 = arith.constant 0 : i32
    return %arg0, %c0_i32 : i32, i32
  }
  func.func @transform_1(%arg0: i32) -> (i32, i32) {
    %c0_i32 = arith.constant 0 : i32
    %c0_i32_0 = arith.constant 0 : i32
    return %arg0, %c0_i32 : i32, i32
  }
  func.func @transform_2(%arg0: i32) -> (i32, i32) {
    %c0_i32 = arith.constant 0 : i32
    %c0_i32_0 = arith.constant 0 : i32
    %c0_i32_1 = arith.constant 0 : i32
    return %c0_i32, %c0_i32_0 : i32, i32
  }
  func.func @transform_3(%arg0: i32) -> (i32, i32) {
    %c0_i32 = arith.constant 0 : i32
    %c0_i32_0 = arith.constant 0 : i32
    %c0_i32_1 = arith.constant 0 : i32
    return %c0_i32, %c0_i32_0 : i32, i32
  }
  func.func @transform_4(%arg0: i32) -> (i32, i32) {
    %c0_i32 = arith.constant 0 : i32
    %c0_i32_0 = arith.constant 0 : i32
    %c0_i32_1 = arith.constant 0 : i32
    return %c0_i32, %c0_i32_0 : i32, i32
  }
  func.func @transform_5(%arg0: i32) -> (i32, i32) {
    %c0_i32 = arith.constant 0 : i32
    %c0_i32_0 = arith.constant 0 : i32
    %c0_i32_1 = arith.constant 0 : i32
    return %c0_i32, %c0_i32_0 : i32, i32
  }
  func.func @transform_6(%arg0: i32) -> (i32, i32) {
    %c0_i32 = arith.constant 0 : i32
    %c0_i32_0 = arith.constant 0 : i32
    %c0_i32_1 = arith.constant 0 : i32
    return %c0_i32, %c0_i32_0 : i32, i32
  }
  func.func @transform_7(%arg0: i32) -> (i32, i32) {
    %c0_i32 = arith.constant 0 : i32
    %c0_i32_0 = arith.constant 0 : i32
    %c0_i32_1 = arith.constant 0 : i32
    return %c0_i32, %c0_i32_0 : i32, i32
  }
  func.func @transform_8(%arg0: i32) -> (i32, i32) {
    %c0_i32 = arith.constant 0 : i32
    %c0_i32_0 = arith.constant 0 : i32
    %c0_i32_1 = arith.constant 0 : i32
    return %c0_i32, %c0_i32_0 : i32, i32
  }
  func.func @transform_9(%arg0: i32) -> (i32, i32) {
    %c0_i32 = arith.constant 0 : i32
    %c0_i32_0 = arith.constant 0 : i32
    %c0_i32_1 = arith.constant 0 : i32
    return %c0_i32, %c0_i32_0 : i32, i32
  }
  func.func @transform_10(%arg0: i32) -> (i32, i32) {
    %c0_i32 = arith.constant 0 : i32
    %c0_i32_0 = arith.constant 0 : i32
    return %arg0, %c0_i32 : i32, i32
  }
}

module attributes {stable_mosaic.version = 11 : i64} {
  func.func @_actor_kernel(%arg0: i32, %arg1: memref<2x16xbf16, #tpu.memory_space<vmem>>, %arg2: memref<2x8xbf16, #tpu.memory_space<vmem>>, %arg3: memref<24x256xbf16, #tpu.memory_space<vmem>>, %arg4: memref<1x256xf32, #tpu.memory_space<vmem>>, %arg5: memref<256x256xbf16, #tpu.memory_space<vmem>>, %arg6: memref<1x256xf32, #tpu.memory_space<vmem>>, %arg7: memref<256x256xbf16, #tpu.memory_space<vmem>>, %arg8: memref<1x256xf32, #tpu.memory_space<vmem>>, %arg9: memref<256x128xbf16, #tpu.memory_space<vmem>>, %arg10: memref<1x128xf32, #tpu.memory_space<vmem>>, %arg11: memref<2x4xf32, #tpu.memory_space<vmem>>) attributes {dimension_semantics = [#tpu.dimension_semantics<parallel>], iteration_bounds = array<i64: 1>, scalar_prefetch = 0 : i64, scratch_operands = 0 : i64, tpu.core_type = #tpu.core_type<tc>, window_params = [{transform_indices = @transform_0, window_bounds = array<i64: 2, 16>}, {transform_indices = @transform_1, window_bounds = array<i64: 2, 8>}, {pipeline_mode = #tpu.pipeline_mode<synchronous>, transform_indices = @transform_2, window_bounds = array<i64: 24, 256>}, {pipeline_mode = #tpu.pipeline_mode<synchronous>, transform_indices = @transform_3, window_bounds = array<i64: 1, 256>}, {pipeline_mode = #tpu.pipeline_mode<synchronous>, transform_indices = @transform_4, window_bounds = array<i64: 256, 256>}, {pipeline_mode = #tpu.pipeline_mode<synchronous>, transform_indices = @transform_5, window_bounds = array<i64: 1, 256>}, {pipeline_mode = #tpu.pipeline_mode<synchronous>, transform_indices = @transform_6, window_bounds = array<i64: 256, 256>}, {pipeline_mode = #tpu.pipeline_mode<synchronous>, transform_indices = @transform_7, window_bounds = array<i64: 1, 256>}, {pipeline_mode = #tpu.pipeline_mode<synchronous>, transform_indices = @transform_8, window_bounds = array<i64: 256, 128>}, {pipeline_mode = #tpu.pipeline_mode<synchronous>, transform_indices = @transform_9, window_bounds = array<i64: 1, 128>}, {transform_indices = @transform_10, window_bounds = array<i64: 2, 4>}]} {
    %c0 = arith.constant 0 : index
    %c0_0 = arith.constant 0 : index
    %0 = vector.load %arg1[%c0, %c0_0] : memref<2x16xbf16, #tpu.memory_space<vmem>>, vector<2x16xbf16>
    %c0_1 = arith.constant 0 : index
    %c0_2 = arith.constant 0 : index
    %1 = vector.load %arg3[%c0_1, %c0_2] : memref<24x256xbf16, #tpu.memory_space<vmem>>, vector<16x256xbf16>
    %cst = arith.constant dense<0.000000e+00> : vector<2x256xf32>
    %2 = tpu.matmul %0, %1, %cst {dimension_numbers = #tpu.dot_dimension_numbers<[1], [0], [0], [1], [0, 0, 1, 1], [], []>} : vector<2x16xbf16>, vector<16x256xbf16>, vector<2x256xf32> -> vector<2x256xf32>
    %c0_3 = arith.constant 0 : index
    %c0_4 = arith.constant 0 : index
    %3 = vector.load %arg2[%c0_3, %c0_4] : memref<2x8xbf16, #tpu.memory_space<vmem>>, vector<2x8xbf16>
    %c16 = arith.constant 16 : index
    %c0_5 = arith.constant 0 : index
    %4 = vector.load %arg3[%c16, %c0_5] : memref<24x256xbf16, #tpu.memory_space<vmem>>, vector<8x256xbf16>
    %cst_6 = arith.constant dense<0.000000e+00> : vector<2x256xf32>
    %5 = tpu.matmul %3, %4, %cst_6 {dimension_numbers = #tpu.dot_dimension_numbers<[1], [0], [0], [1], [0, 0, 1, 1], [], []>} : vector<2x8xbf16>, vector<8x256xbf16>, vector<2x256xf32> -> vector<2x256xf32>
    %6 = arith.addf %2, %5 : vector<2x256xf32>
    %c0_7 = arith.constant 0 : index
    %c0_8 = arith.constant 0 : index
    %7 = vector.load %arg4[%c0_7, %c0_8] : memref<1x256xf32, #tpu.memory_space<vmem>>, vector<1x256xf32>
    %8 = vector.broadcast %7 : vector<1x256xf32> to vector<2x256xf32>
    %9 = arith.addf %6, %8 : vector<2x256xf32>
    %cst_9 = arith.constant 0.000000e+00 : f32
    %10 = vector.broadcast %cst_9 : f32 to vector<2x256xf32>
    %11 = arith.maximumf %9, %10 : vector<2x256xf32>
    %12 = arith.truncf %11 : vector<2x256xf32> to vector<2x256xbf16>
    %c0_10 = arith.constant 0 : index
    %c0_11 = arith.constant 0 : index
    %13 = vector.load %arg5[%c0_10, %c0_11] : memref<256x256xbf16, #tpu.memory_space<vmem>>, vector<256x256xbf16>
    %cst_12 = arith.constant dense<0.000000e+00> : vector<2x256xf32>
    %14 = tpu.matmul %12, %13, %cst_12 {dimension_numbers = #tpu.dot_dimension_numbers<[1], [0], [0], [1], [0, 0, 1, 1], [], []>} : vector<2x256xbf16>, vector<256x256xbf16>, vector<2x256xf32> -> vector<2x256xf32>
    %c0_13 = arith.constant 0 : index
    %c0_14 = arith.constant 0 : index
    %15 = vector.load %arg6[%c0_13, %c0_14] : memref<1x256xf32, #tpu.memory_space<vmem>>, vector<1x256xf32>
    %16 = vector.broadcast %15 : vector<1x256xf32> to vector<2x256xf32>
    %17 = arith.addf %14, %16 : vector<2x256xf32>
    %cst_15 = arith.constant 0.000000e+00 : f32
    %18 = vector.broadcast %cst_15 : f32 to vector<2x256xf32>
    %19 = arith.maximumf %17, %18 : vector<2x256xf32>
    %20 = arith.truncf %19 : vector<2x256xf32> to vector<2x256xbf16>
    %c0_16 = arith.constant 0 : index
    %c0_17 = arith.constant 0 : index
    %21 = vector.load %arg7[%c0_16, %c0_17] : memref<256x256xbf16, #tpu.memory_space<vmem>>, vector<256x256xbf16>
    %cst_18 = arith.constant dense<0.000000e+00> : vector<2x256xf32>
    %22 = tpu.matmul %20, %21, %cst_18 {dimension_numbers = #tpu.dot_dimension_numbers<[1], [0], [0], [1], [0, 0, 1, 1], [], []>} : vector<2x256xbf16>, vector<256x256xbf16>, vector<2x256xf32> -> vector<2x256xf32>
    %c0_19 = arith.constant 0 : index
    %c0_20 = arith.constant 0 : index
    %23 = vector.load %arg8[%c0_19, %c0_20] : memref<1x256xf32, #tpu.memory_space<vmem>>, vector<1x256xf32>
    %24 = vector.broadcast %23 : vector<1x256xf32> to vector<2x256xf32>
    %25 = arith.addf %22, %24 : vector<2x256xf32>
    %cst_21 = arith.constant 0.000000e+00 : f32
    %26 = vector.broadcast %cst_21 : f32 to vector<2x256xf32>
    %27 = arith.maximumf %25, %26 : vector<2x256xf32>
    %28 = arith.truncf %27 : vector<2x256xf32> to vector<2x256xbf16>
    %c0_22 = arith.constant 0 : index
    %c0_23 = arith.constant 0 : index
    %29 = vector.load %arg9[%c0_22, %c0_23] : memref<256x128xbf16, #tpu.memory_space<vmem>>, vector<256x128xbf16>
    %cst_24 = arith.constant dense<0.000000e+00> : vector<2x128xf32>
    %30 = tpu.matmul %28, %29, %cst_24 {dimension_numbers = #tpu.dot_dimension_numbers<[1], [0], [0], [1], [0, 0, 1, 1], [], []>} : vector<2x256xbf16>, vector<256x128xbf16>, vector<2x128xf32> -> vector<2x128xf32>
    %c0_25 = arith.constant 0 : index
    %c0_26 = arith.constant 0 : index
    %31 = vector.load %arg10[%c0_25, %c0_26] : memref<1x128xf32, #tpu.memory_space<vmem>>, vector<1x128xf32>
    %32 = vector.broadcast %31 : vector<1x128xf32> to vector<2x128xf32>
    %33 = arith.addf %30, %32 : vector<2x128xf32>
    %34 = vector.extract_strided_slice %33 {offsets = [0, 0], sizes = [2, 4], strides = [1, 1]} : vector<2x128xf32> to vector<2x4xf32>
    %35 = math.tanh %34 : vector<2x4xf32>
    %cst_27 = arith.constant 2.000000e+00 : f32
    %36 = vector.broadcast %cst_27 : f32 to vector<2x4xf32>
    %37 = arith.mulf %36, %35 : vector<2x4xf32>
    %c0_28 = arith.constant 0 : index
    %c0_29 = arith.constant 0 : index
    %38 = vector.load %arg11[%c0_28, %c0_29] : memref<2x4xf32, #tpu.memory_space<vmem>>, vector<2x4xf32>
    tpu.vector_store %arg11[%c0_28, %c0_29], %37 {strides = array<i32>} : memref<2x4xf32, #tpu.memory_space<vmem>>, vector<2x4xf32>,
    return
  }
  func.func @transform_0(%arg0: i32) -> (i32, i32) {
    %c0_i32 = arith.constant 0 : i32
    %c0_i32_0 = arith.constant 0 : i32
    return %arg0, %c0_i32 : i32, i32
  }
  func.func @transform_1(%arg0: i32) -> (i32, i32) {
    %c0_i32 = arith.constant 0 : i32
    %c0_i32_0 = arith.constant 0 : i32
    return %arg0, %c0_i32 : i32, i32
  }
  func.func @transform_2(%arg0: i32) -> (i32, i32) {
    %c0_i32 = arith.constant 0 : i32
    %c0_i32_0 = arith.constant 0 : i32
    %c0_i32_1 = arith.constant 0 : i32
    return %c0_i32, %c0_i32_0 : i32, i32
  }
  func.func @transform_3(%arg0: i32) -> (i32, i32) {
    %c0_i32 = arith.constant 0 : i32
    %c0_i32_0 = arith.constant 0 : i32
    %c0_i32_1 = arith.constant 0 : i32
    return %c0_i32, %c0_i32_0 : i32, i32
  }
  func.func @transform_4(%arg0: i32) -> (i32, i32) {
    %c0_i32 = arith.constant 0 : i32
    %c0_i32_0 = arith.constant 0 : i32
    %c0_i32_1 = arith.constant 0 : i32
    return %c0_i32, %c0_i32_0 : i32, i32
  }
  func.func @transform_5(%arg0: i32) -> (i32, i32) {
    %c0_i32 = arith.constant 0 : i32
    %c0_i32_0 = arith.constant 0 : i32
    %c0_i32_1 = arith.constant 0 : i32
    return %c0_i32, %c0_i32_0 : i32, i32
  }
  func.func @transform_6(%arg0: i32) -> (i32, i32) {
    %c0_i32 = arith.constant 0 : i32
    %c0_i32_0 = arith.constant 0 : i32
    %c0_i32_1 = arith.constant 0 : i32
    return %c0_i32, %c0_i32_0 : i32, i32
  }
  func.func @transform_7(%arg0: i32) -> (i32, i32) {
    %c0_i32 = arith.constant 0 : i32
    %c0_i32_0 = arith.constant 0 : i32
    %c0_i32_1 = arith.constant 0 : i32
    return %c0_i32, %c0_i32_0 : i32, i32
  }
  func.func @transform_8(%arg0: i32) -> (i32, i32) {
    %c0_i32 = arith.constant 0 : i32
    %c0_i32_0 = arith.constant 0 : i32
    %c0_i32_1 = arith.constant 0 : i32
    return %c0_i32, %c0_i32_0 : i32, i32
  }
  func.func @transform_9(%arg0: i32) -> (i32, i32) {
    %c0_i32 = arith.constant 0 : i32
    %c0_i32_0 = arith.constant 0 : i32
    %c0_i32_1 = arith.constant 0 : i32
    return %c0_i32, %c0_i32_0 : i32, i32
  }
  func.func @transform_10(%arg0: i32) -> (i32, i32) {
    %c0_i32 = arith.constant 0 : i32
    %c0_i32_0 = arith.constant 0 : i32
    return %arg0, %c0_i32 : i32, i32
  }
}

</mosaic_0001>

<llo_original>
// kernel: tpu_custom_call.1
$region0: #{tpu_custom_call.1}
  #allocation0 [shape = 'u32[]', space=smem, size = 0x4, offset = 0x4, fixed_abs, tag = 'smem constant byte address 0x4 - core index']
  #allocation1 [shape = 'u32[72,128]{1,0:T(1,128)}', space=vmem, size = 0x9000, scoped, tag = 'internal scratch']
  %s0 = inlined_call_operand.hbm [shape: bf16[2,16], index: 0, kind: input, shape index: {}]
  %s1 = inlined_call_operand.hbm [shape: bf16[2,8], index: 1, kind: input, shape index: {}]
  %s2 = inlined_call_operand.hbm [shape: bf16[24,256], index: 2, kind: input, shape index: {}]
  %s3 = inlined_call_operand.vmem [shape: f32[1,256], index: 3, kind: input, shape index: {}]
  %s4 = inlined_call_operand.hbm [shape: bf16[256,256], index: 4, kind: input, shape index: {}]
  %s5 = inlined_call_operand.vmem [shape: f32[1,256], index: 5, kind: input, shape index: {}]
  %s6 = inlined_call_operand.hbm [shape: bf16[256,256], index: 6, kind: input, shape index: {}]
  %s7 = inlined_call_operand.vmem [shape: f32[1,256], index: 7, kind: input, shape index: {}]
  %s8 = inlined_call_operand.hbm [shape: bf16[256,128], index: 8, kind: input, shape index: {}]
  %s9 = inlined_call_operand.vmem [shape: f32[1,128], index: 9, kind: input, shape index: {}]
  %s10 = inlined_call_operand.hbm [shape: f32[2,4], index: 10, kind: output, shape index: {}]
  %s11 = sld [smem:[#allocation0]]
  $region74: #{tpu_custom_call.1} parent=0
    _
  %s13 = ssub.s32 1, %s11
  %s14 = scalar_select 0, %s13, %s11
  $region1: #{tpu_custom_call.1} parent=0
    #allocation2 [shape = 'u8[512]{0}', space=vmem, size = 0x400, scoped, tag = 'input window, operand 0, single buffered']
    #allocation3 [shape = 's32[1]{0}', space=sflag, size = 0x4, scoped, tag = 'scoped memory for tpu_custom_call.1']
    #allocation4 [shape = 's32[1]{0}', space=sflag, size = 0x4, scoped, tag = 'scoped memory for tpu_custom_call.1']
    #allocation5 [shape = 'u8[512]{0}', space=vmem, size = 0x400, scoped, tag = 'input window, operand 1, single buffered']
    #allocation6 [shape = 's32[1]{0}', space=sflag, size = 0x4, scoped, tag = 'scoped memory for tpu_custom_call.1']
    #allocation7 [shape = 'u8[12288]{0}', space=vmem, size = 0x3000, scoped, tag = 'input window, operand 2, single buffered']
    #allocation8 [shape = 'u8[131072]{0}', space=vmem, size = 0x20000, scoped, tag = 'input window, operand 4, single buffered']
    #allocation9 [shape = 's32[1]{0}', space=sflag, size = 0x4, scoped, tag = 'scoped memory for tpu_custom_call.1']
    #allocation10 [shape = 'u8[131072]{0}', space=vmem, size = 0x20000, scoped, tag = 'input window, operand 6, single buffered']
    #allocation11 [shape = 'u8[65536]{0}', space=vmem, size = 0x10000, scoped, tag = 'input window, operand 8, single buffered']
    #allocation12 [shape = 's32[1]{0}', space=sflag, size = 0x4, scoped, tag = 'scoped memory for tpu_custom_call.1']
    #allocation13 [shape = 'u8[1024]{0}', space=vmem, size = 0x400, scoped, tag = 'output window, operand 0, single buffered']
    %15 = vsyncpa [#allocation3], 0
    %16 = vsyncpa [#allocation6], 0
    %17 = vsyncpa [#allocation9], 0
    %18 = vsyncpa [#allocation12], 0
    %19 = vsyncpa [#allocation4], 0
    // Predicated region
    $region2: #{tpu_custom_call.1} parent=1 // pred_check
      _
    $region3: #{tpu_custom_call.1} parent=1 // pred_check_branch
      %21 = sbr.rel (0) target = $region5
    $region4: #{tpu_custom_call.1} parent=1 // pred_region
      %23 = vsyncadd [#allocation3], 0
      %s25 = sshll.u32 %s0, 4
      %s26 = int_to_ptr.hbm [resolvable:$true] %s25
      %s27 = sshll.u32 [#allocation2], 4
      %s28 = int_to_ptr.vmem [resolvable:$true] %s27
      %30 = dma.hbm_to_vmem [thread:$0]  %s26, 16, %s28, [#allocation3]
    $region5: #{tpu_custom_call.1} parent=1 // pred_fallthru
      _
    // Predicated region
    $region6: #{tpu_custom_call.1} parent=1 // pred_check
      _
    $region7: #{tpu_custom_call.1} parent=1 // pred_check_branch
      %32 = sbr.rel (0) target = $region9
    $region8: #{tpu_custom_call.1} parent=1 // pred_region
      %34 = vsyncadd [#allocation6], 0
      %s36 = sshll.u32 %s1, 4
      %s37 = int_to_ptr.hbm [resolvable:$true] %s36
      %s38 = sshll.u32 [#allocation5], 4
      %s39 = int_to_ptr.vmem [resolvable:$true] %s38
      %41 = dma.hbm_to_vmem [thread:$0]  %s37, 16, %s39, [#allocation6]
    $region9: #{tpu_custom_call.1} parent=1 // pred_fallthru
      _
    // Predicated region
    $region10: #{tpu_custom_call.1} parent=1 // pred_check
      _
    $region11: #{tpu_custom_call.1} parent=1 // pred_check_branch
      %43 = sbr.rel (0) target = $region13
    $region12: #{tpu_custom_call.1} parent=1 // pred_region
      %45 = vsyncadd [#allocation6], 0
      %s46 = sshll.u32 %s2, 4
      %s47 = int_to_ptr.hbm [resolvable:$true] %s46
      %s48 = sshll.u32 [#allocation7], 4
      %s49 = int_to_ptr.vmem [resolvable:$true] %s48
      %54 = dma.hbm_to_vmem [thread:$0]  %s47, 384, %s49, [#allocation6], 128, 128, 8
    $region13: #{tpu_custom_call.1} parent=1 // pred_fallthru
      _
    // Predicated region
    $region14: #{tpu_custom_call.1} parent=1 // pred_check
      _
    $region15: #{tpu_custom_call.1} parent=1 // pred_check_branch
      %56 = sbr.rel (0) target = $region17
    $region16: #{tpu_custom_call.1} parent=1 // pred_region
      _
    $region17: #{tpu_custom_call.1} parent=1 // pred_fallthru
      _
    // Predicated region
    $region18: #{tpu_custom_call.1} parent=1 // pred_check
      _
    $region19: #{tpu_custom_call.1} parent=1 // pred_check_branch
      %58 = sbr.rel (0) target = $region21
    $region20: #{tpu_custom_call.1} parent=1 // pred_region
      %60 = vsyncadd [#allocation9], 0
      %s61 = sshll.u32 %s4, 4
      %s62 = int_to_ptr.hbm [resolvable:$true] %s61
      %s63 = sshll.u32 [#allocation8], 4
      %s64 = int_to_ptr.vmem [resolvable:$true] %s63
      %69 = dma.hbm_to_vmem [thread:$0]  %s62, 4096, %s64, [#allocation9], 128, 128, 8
    $region21: #{tpu_custom_call.1} parent=1 // pred_fallthru
      _
    // Predicated region
    $region22: #{tpu_custom_call.1} parent=1 // pred_check
      _
    $region23: #{tpu_custom_call.1} parent=1 // pred_check_branch
      %71 = sbr.rel (0) target = $region25
    $region24: #{tpu_custom_call.1} parent=1 // pred_region
      _
    $region25: #{tpu_custom_call.1} parent=1 // pred_fallthru
      _
    // Predicated region
    $region26: #{tpu_custom_call.1} parent=1 // pred_check
      _
    $region27: #{tpu_custom_call.1} parent=1 // pred_check_branch
      %73 = sbr.rel (0) target = $region29
    $region28: #{tpu_custom_call.1} parent=1 // pred_region
      %75 = vsyncadd [#allocation9], 0
      %s76 = sshll.u32 %s6, 4
      %s77 = int_to_ptr.hbm [resolvable:$true] %s76
      %s78 = sshll.u32 [#allocation10], 4
      %s79 = int_to_ptr.vmem [resolvable:$true] %s78
      %84 = dma.hbm_to_vmem [thread:$0]  %s77, 4096, %s79, [#allocation9], 128, 128, 8
    $region29: #{tpu_custom_call.1} parent=1 // pred_fallthru
      _
    // Predicated region
    $region30: #{tpu_custom_call.1} parent=1 // pred_check
      _
    $region31: #{tpu_custom_call.1} parent=1 // pred_check_branch
      %86 = sbr.rel (0) target = $region33
    $region32: #{tpu_custom_call.1} parent=1 // pred_region
      _
    $region33: #{tpu_custom_call.1} parent=1 // pred_fallthru
      _
    // Predicated region
    $region34: #{tpu_custom_call.1} parent=1 // pred_check
      _
    $region35: #{tpu_custom_call.1} parent=1 // pred_check_branch
      %88 = sbr.rel (0) target = $region37
    $region36: #{tpu_custom_call.1} parent=1 // pred_region
      %90 = vsyncadd [#allocation12], 0
      %s91 = sshll.u32 %s8, 4
      %s92 = int_to_ptr.hbm [resolvable:$true] %s91
      %s93 = sshll.u32 [#allocation11], 4
      %s94 = int_to_ptr.vmem [resolvable:$true] %s93
      %99 = dma.hbm_to_vmem [thread:$0]  %s92, 2048, %s94, [#allocation12], 64, 64, 4
    $region37: #{tpu_custom_call.1} parent=1 // pred_fallthru
      _
    // Predicated region
    $region38: #{tpu_custom_call.1} parent=1 // pred_check
      _
    $region39: #{tpu_custom_call.1} parent=1 // pred_check_branch
      %101 = sbr.rel (0) target = $region41
    $region40: #{tpu_custom_call.1} parent=1 // pred_region
      _
    $region41: #{tpu_custom_call.1} parent=1 // pred_fallthru
      _
    // Predicated region
    $region42: #{tpu_custom_call.1} parent=1 // pred_check
      _
    $region43: #{tpu_custom_call.1} parent=1 // pred_check_branch
      %103 = sbr.rel (0) target = $region45
    $region44: #{tpu_custom_call.1} parent=1 // pred_region
      %105 = dma.done [#allocation3], 16
    $region45: #{tpu_custom_call.1} parent=1 // pred_fallthru
      _
    // Predicated region
    $region46: #{tpu_custom_call.1} parent=1 // pred_check
      _
    $region47: #{tpu_custom_call.1} parent=1 // pred_check_branch
      %107 = sbr.rel (0) target = $region49
    $region48: #{tpu_custom_call.1} parent=1 // pred_region
      %109 = dma.done [#allocation6], 16
    $region49: #{tpu_custom_call.1} parent=1 // pred_fallthru
      _
    // Predicated region
    $region50: #{tpu_custom_call.1} parent=1 // pred_check
      _
    $region51: #{tpu_custom_call.1} parent=1 // pred_check_branch
      %111 = sbr.rel (0) target = $region53
    $region52: #{tpu_custom_call.1} parent=1 // pred_region
      %113 = dma.done [#allocation6], 384
    $region53: #{tpu_custom_call.1} parent=1 // pred_fallthru
      _
    // Predicated region
    $region54: #{tpu_custom_call.1} parent=1 // pred_check
      _
    $region55: #{tpu_custom_call.1} parent=1 // pred_check_branch
      %115 = sbr.rel (0) target = $region57
    $region56: #{tpu_custom_call.1} parent=1 // pred_region
      %117 = dma.done [#allocation9], 4096
    $region57: #{tpu_custom_call.1} parent=1 // pred_fallthru
      _
    // Predicated region
    $region58: #{tpu_custom_call.1} parent=1 // pred_check
      _
    $region59: #{tpu_custom_call.1} parent=1 // pred_check_branch
      %119 = sbr.rel (0) target = $region61
    $region60: #{tpu_custom_call.1} parent=1 // pred_region
      %121 = dma.done [#allocation9], 4096
    $region61: #{tpu_custom_call.1} parent=1 // pred_fallthru
      _
    // Predicated region
    $region62: #{tpu_custom_call.1} parent=1 // pred_check
      _
    $region63: #{tpu_custom_call.1} parent=1 // pred_check_branch
      %123 = sbr.rel (0) target = $region65
    $region64: #{tpu_custom_call.1} parent=1 // pred_region
      %125 = dma.done [#allocation12], 2048
    $region65: #{tpu_custom_call.1} parent=1 // pred_fallthru
      _
    %v127 = vld [vmem:[#allocation2] sm:$0x1]
    %v128 = vld [vmem:[#allocation5] sm:$0x1]
    %130 = vst [vmem:[#allocation1] ss:$9 sm:$0xff] %v128
    %v131 = vld [vmem:[#allocation1] sm:$0xff]
    %133 = vrot.lane.b32.xlu0 %v131, 16
    %v134 = vpop.permute.xlu0 %133
    %vm135 = vcmask 130048
    %v138 = vsel %vm135, %v127, %v134
    %v139 = vld [vmem:[#allocation7] sm:$0xff]
    %v140 = vld [vmem:[#allocation7 + $0x8] sm:$0xff]
    %v141 = vld [vmem:[#allocation7 + $0x10] sm:$0xff]
    %v142 = vld [vmem:[%s3] sm:$0x3]
    %v144 = vperm.slane %v142, 0
    %v145 = vperm.slane %v142, 1
    %v151 = vunpack.c.l.b16 %v139
    %v152 = vunpack.c.h.b16 %v139
    %v153 = vunpack.c.l.b16 %v140
    %v154 = vunpack.c.h.b16 %v140
    %v155 = vunpack.c.l.b16 %v141
    %v156 = vunpack.c.h.b16 %v141
    %v157 = vpack.c.b16 %v153, %v151
    %v158 = vpack.c.b16 %v154, %v152
    %v159 = vpack.c.b16 %v155, %v155
    %v160 = vpack.c.b16 %v156, %v156
    %vm163 = vcmask 195584
    %v164 = vsel %vm163, %v138, 0
    %vm166 = vcmask 1043456
    %v168 = vsel %vm166, %v159, 0
    %v171 = vsel %vm166, %v160, 0
    %173 = vmatpush.bf16.msra.mxu0 0
    %174 = vmatpush.bf16.msra.mxu0 0
    %175 = vmatpush.bf16.msra.mxu0 0
    %176 = vmatpush.bf16.msra.mxu0 0
    %177 = vmatpush.bf16.msra.mxu0 0
    %178 = vmatpush.bf16.msra.mxu0 0
    %179 = vmatpush.bf16.msra.mxu0 %v168
    %180 = vmatpush.bf16.msra.mxu0 %v157
    %181 = vmatmul.bf16.gmra.mxu0 %v164
    %v182 = vpop.f32.mrf.mxu0
    %v183 = vadd.f32 %v144, %v182
    %v184 = vpop.f32.mrf.mxu0
    %185 = vdwg.mxu0
    %186 = vmatpush.bf16.msra.mxu0 0
    %187 = vmatpush.bf16.msra.mxu0 0
    %188 = vmatpush.bf16.msra.mxu0 0
    %189 = vmatpush.bf16.msra.mxu0 0
    %190 = vmatpush.bf16.msra.mxu0 0
    %191 = vmatpush.bf16.msra.mxu0 0
    %192 = vmatpush.bf16.msra.mxu0 %v171
    %193 = vmatpush.bf16.msra.mxu0 %v158
    %194 = vmatmul.bf16.gmra.mxu0 %v164
    %v195 = vpop.f32.mrf.mxu0
    %v196 = vadd.f32 %v145, %v195
    %v197 = vpop.f32.mrf.mxu0
    %198 = vdwg.mxu0
    %v199 = vmax.f32 %v183, 0.0
    %v200 = vmax.f32 %v196, 0.0
    %v201 = vpack.c.bf16 %v199, %v199
    %v202 = vpack.c.bf16 %v200, %v200
    %v203 = vld [vmem:[#allocation8] sm:$0xff]
    %v204 = vld [vmem:[#allocation8 + $0x8] sm:$0xff]
    %v205 = vld [vmem:[#allocation8 + $0x10] sm:$0xff]
    %v206 = vld [vmem:[#allocation8 + $0x18] sm:$0xff]
    %v207 = vld [vmem:[#allocation8 + $0x20] sm:$0xff]
    %v208 = vld [vmem:[#allocation8 + $0x28] sm:$0xff]
    %v209 = vld [vmem:[#allocation8 + $0x30] sm:$0xff]
    %v210 = vld [vmem:[#allocation8 + $0x38] sm:$0xff]
    %v211 = vld [vmem:[#allocation8 + $0x40] sm:$0xff]
    %v212 = vld [vmem:[#allocation8 + $0x48] sm:$0xff]
    %v213 = vld [vmem:[#allocation8 + $0x50] sm:$0xff]
    %v214 = vld [vmem:[#allocation8 + $0x58] sm:$0xff]
    %v215 = vld [vmem:[#allocation8 + $0x60] sm:$0xff]
    %v216 = vld [vmem:[#allocation8 + $0x68] sm:$0xff]
    %v217 = vld [vmem:[#allocation8 + $0x70] sm:$0xff]
    %v218 = vld [vmem:[#allocation8 + $0x78] sm:$0xff]
    %v219 = vld [vmem:[#allocation8 + $0x80] sm:$0xff]
    %v220 = vld [vmem:[#allocation8 + $0x88] sm:$0xff]
    %v221 = vld [vmem:[#allocation8 + $0x90] sm:$0xff]
    %v222 = vld [vmem:[#allocation8 + $0x98] sm:$0xff]
    %v223 = vld [vmem:[#allocation8 + $0xa0] sm:$0xff]
    %v224 = vld [vmem:[#allocation8 + $0xa8] sm:$0xff]
    %v225 = vld [vmem:[#allocation8 + $0xb0] sm:$0xff]
    %v226 = vld [vmem:[#allocation8 + $0xb8] sm:$0xff]
    %v227 = vld [vmem:[#allocation8 + $0xc0] sm:$0xff]
    %v228 = vld [vmem:[#allocation8 + $0xc8] sm:$0xff]
    %v229 = vld [vmem:[#allocation8 + $0xd0] sm:$0xff]
    %v230 = vld [vmem:[#allocation8 + $0xd8] sm:$0xff]
    %v231 = vld [vmem:[#allocation8 + $0xe0] sm:$0xff]
    %v232 = vld [vmem:[#allocation8 + $0xe8] sm:$0xff]
    %v233 = vld [vmem:[#allocation8 + $0xf0] sm:$0xff]
    %v234 = vld [vmem:[#allocation8 + $0xf8] sm:$0xff]
    %v235 = vld [vmem:[%s5] sm:$0x3]
    %v237 = vperm.slane %v235, 0
    %v238 = vperm.slane %v235, 1
    %v273 = vunpack.c.l.b16 %v203
    %v274 = vunpack.c.h.b16 %v203
    %v275 = vunpack.c.l.b16 %v204
    %v276 = vunpack.c.h.b16 %v204
    %v277 = vunpack.c.l.b16 %v205
    %v278 = vunpack.c.h.b16 %v205
    %v279 = vunpack.c.l.b16 %v206
    %v280 = vunpack.c.h.b16 %v206
    %v281 = vunpack.c.l.b16 %v207
    %v282 = vunpack.c.h.b16 %v207
    %v283 = vunpack.c.l.b16 %v208
    %v284 = vunpack.c.h.b16 %v208
    %v285 = vunpack.c.l.b16 %v209
    %v286 = vunpack.c.h.b16 %v209
    %v287 = vunpack.c.l.b16 %v210
    %v288 = vunpack.c.h.b16 %v210
    %v289 = vunpack.c.l.b16 %v211
    %v290 = vunpack.c.h.b16 %v211
    %v291 = vunpack.c.l.b16 %v212
    %v292 = vunpack.c.h.b16 %v212
    %v293 = vunpack.c.l.b16 %v213
    %v294 = vunpack.c.h.b16 %v213
    %v295 = vunpack.c.l.b16 %v214
    %v296 = vunpack.c.h.b16 %v214
    %v297 = vunpack.c.l.b16 %v215
    %v298 = vunpack.c.h.b16 %v215
    %v299 = vunpack.c.l.b16 %v216
    %v300 = vunpack.c.h.b16 %v216
    %v301 = vunpack.c.l.b16 %v217
    %v302 = vunpack.c.h.b16 %v217
    %v303 = vunpack.c.l.b16 %v218
    %v304 = vunpack.c.h.b16 %v218
    %v305 = vunpack.c.l.b16 %v219
    %v306 = vunpack.c.h.b16 %v219
    %v307 = vunpack.c.l.b16 %v220
    %v308 = vunpack.c.h.b16 %v220
    %v309 = vunpack.c.l.b16 %v221
    %v310 = vunpack.c.h.b16 %v221
    %v311 = vunpack.c.l.b16 %v222
    %v312 = vunpack.c.h.b16 %v222
    %v313 = vunpack.c.l.b16 %v223
    %v314 = vunpack.c.h.b16 %v223
    %v315 = vunpack.c.l.b16 %v224
    %v316 = vunpack.c.h.b16 %v224
    %v317 = vunpack.c.l.b16 %v225
    %v318 = vunpack.c.h.b16 %v225
    %v319 = vunpack.c.l.b16 %v226
    %v320 = vunpack.c.h.b16 %v226
    %v321 = vunpack.c.l.b16 %v227
    %v322 = vunpack.c.h.b16 %v227
    %v323 = vunpack.c.l.b16 %v228
    %v324 = vunpack.c.h.b16 %v228
    %v325 = vunpack.c.l.b16 %v229
    %v326 = vunpack.c.h.b16 %v229
    %v327 = vunpack.c.l.b16 %v230
    %v328 = vunpack.c.h.b16 %v230
    %v329 = vunpack.c.l.b16 %v231
    %v330 = vunpack.c.h.b16 %v231
    %v331 = vunpack.c.l.b16 %v232
    %v332 = vunpack.c.h.b16 %v232
    %v333 = vunpack.c.l.b16 %v233
    %v334 = vunpack.c.h.b16 %v233
    %v335 = vunpack.c.l.b16 %v234
    %v336 = vunpack.c.h.b16 %v234
    %v337 = vpack.c.b16 %v275, %v273
    %v338 = vpack.c.b16 %v276, %v274
    %v339 = vpack.c.b16 %v279, %v277
    %v340 = vpack.c.b16 %v280, %v278
    %v341 = vpack.c.b16 %v283, %v281
    %v342 = vpack.c.b16 %v284, %v282
    %v343 = vpack.c.b16 %v287, %v285
    %v344 = vpack.c.b16 %v288, %v286
    %v345 = vpack.c.b16 %v291, %v289
    %v346 = vpack.c.b16 %v292, %v290
    %v347 = vpack.c.b16 %v295, %v293
    %v348 = vpack.c.b16 %v296, %v294
    %v349 = vpack.c.b16 %v299, %v297
    %v350 = vpack.c.b16 %v300, %v298
    %v351 = vpack.c.b16 %v303, %v301
    %v352 = vpack.c.b16 %v304, %v302
    %v353 = vpack.c.b16 %v307, %v305
    %v354 = vpack.c.b16 %v308, %v306
    %v355 = vpack.c.b16 %v311, %v309
    %v356 = vpack.c.b16 %v312, %v310
    %v357 = vpack.c.b16 %v315, %v313
    %v358 = vpack.c.b16 %v316, %v314
    %v359 = vpack.c.b16 %v319, %v317
    %v360 = vpack.c.b16 %v320, %v318
    %v361 = vpack.c.b16 %v323, %v321
    %v362 = vpack.c.b16 %v324, %v322
    %v363 = vpack.c.b16 %v327, %v325
    %v364 = vpack.c.b16 %v328, %v326
    %v365 = vpack.c.b16 %v331, %v329
    %v366 = vpack.c.b16 %v332, %v330
    %v367 = vpack.c.b16 %v335, %v333
    %v368 = vpack.c.b16 %v336, %v334
    %401 = vmatpush.bf16.msra.mxu0 %v351
    %402 = vmatpush.bf16.msra.mxu0 %v349
    %403 = vmatpush.bf16.msra.mxu0 %v347
    %404 = vmatpush.bf16.msra.mxu0 %v345
    %405 = vmatpush.bf16.msra.mxu0 %v343
    %406 = vmatpush.bf16.msra.mxu0 %v341
    %407 = vmatpush.bf16.msra.mxu0 %v339
    %408 = vmatpush.bf16.msra.mxu0 %v337
    %409 = vmatmul.bf16.gmra.mxu0 %v201
    %v410 = vpop.f32.mrf.mxu0
    %v411 = vadd.f32 %v237, %v410
    %v412 = vpop.f32.mrf.mxu0
    %413 = vdwg.mxu0
    %414 = vmatpush.bf16.msra.mxu0 %v367
    %415 = vmatpush.bf16.msra.mxu0 %v365
    %416 = vmatpush.bf16.msra.mxu0 %v363
    %417 = vmatpush.bf16.msra.mxu0 %v361
    %418 = vmatpush.bf16.msra.mxu0 %v359
    %419 = vmatpush.bf16.msra.mxu0 %v357
    %420 = vmatpush.bf16.msra.mxu0 %v355
    %421 = vmatpush.bf16.msra.mxu0 %v353
    %422 = vmatmul.bf16.gmra.mxu0 %v202
    %v423 = vpop.f32.mrf.mxu0
    %v424 = vadd.f32 %v411, %v423
    %v425 = vpop.f32.mrf.mxu0
    %426 = vdwg.mxu0
    %427 = vmatpush.bf16.msra.mxu0 %v352
    %428 = vmatpush.bf16.msra.mxu0 %v350
    %429 = vmatpush.bf16.msra.mxu0 %v348
    %430 = vmatpush.bf16.msra.mxu0 %v346
    %431 = vmatpush.bf16.msra.mxu0 %v344
    %432 = vmatpush.bf16.msra.mxu0 %v342
    %433 = vmatpush.bf16.msra.mxu0 %v340
    %434 = vmatpush.bf16.msra.mxu0 %v338
    %435 = vmatmul.bf16.gmra.mxu0 %v201
    %v436 = vpop.f32.mrf.mxu0
    %v437 = vadd.f32 %v238, %v436
    %v438 = vpop.f32.mrf.mxu0
    %439 = vdwg.mxu0
    %440 = vmatpush.bf16.msra.mxu0 %v368
    %441 = vmatpush.bf16.msra.mxu0 %v366
    %442 = vmatpush.bf16.msra.mxu0 %v364
    %443 = vmatpush.bf16.msra.mxu0 %v362
    %444 = vmatpush.bf16.msra.mxu0 %v360
    %445 = vmatpush.bf16.msra.mxu0 %v358
    %446 = vmatpush.bf16.msra.mxu0 %v356
    %447 = vmatpush.bf16.msra.mxu0 %v354
    %448 = vmatmul.bf16.gmra.mxu0 %v202
    %v449 = vpop.f32.mrf.mxu0
    %v450 = vadd.f32 %v437, %v449
    %v451 = vpop.f32.mrf.mxu0
    %452 = vdwg.mxu0
    %v453 = vmax.f32 %v424, 0.0
    %v454 = vmax.f32 %v450, 0.0
    %v455 = vpack.c.bf16 %v453, %v453
    %v456 = vpack.c.bf16 %v454, %v454
    %v457 = vld [vmem:[#allocation10] sm:$0xff]
    %v458 = vld [vmem:[#allocation10 + $0x8] sm:$0xff]
    %v459 = vld [vmem:[#allocation10 + $0x10] sm:$0xff]
    %v460 = vld [vmem:[#allocation10 + $0x18] sm:$0xff]
    %v461 = vld [vmem:[#allocation10 + $0x20] sm:$0xff]
    %v462 = vld [vmem:[#allocation10 + $0x28] sm:$0xff]
    %v463 = vld [vmem:[#allocation10 + $0x30] sm:$0xff]
    %v464 = vld [vmem:[#allocation10 + $0x38] sm:$0xff]
    %v465 = vld [vmem:[#allocation10 + $0x40] sm:$0xff]
    %v466 = vld [vmem:[#allocation10 + $0x48] sm:$0xff]
    %v467 = vld [vmem:[#allocation10 + $0x50] sm:$0xff]
    %v468 = vld [vmem:[#allocation10 + $0x58] sm:$0xff]
    %v469 = vld [vmem:[#allocation10 + $0x60] sm:$0xff]
    %v470 = vld [vmem:[#allocation10 + $0x68] sm:$0xff]
    %v471 = vld [vmem:[#allocation10 + $0x70] sm:$0xff]
    %v472 = vld [vmem:[#allocation10 + $0x78] sm:$0xff]
    %v473 = vld [vmem:[#allocation10 + $0x80] sm:$0xff]
    %v474 = vld [vmem:[#allocation10 + $0x88] sm:$0xff]
    %v475 = vld [vmem:[#allocation10 + $0x90] sm:$0xff]
    %v476 = vld [vmem:[#allocation10 + $0x98] sm:$0xff]
    %v477 = vld [vmem:[#allocation10 + $0xa0] sm:$0xff]
    %v478 = vld [vmem:[#allocation10 + $0xa8] sm:$0xff]
    %v479 = vld [vmem:[#allocation10 + $0xb0] sm:$0xff]
    %v480 = vld [vmem:[#allocation10 + $0xb8] sm:$0xff]
    %v481 = vld [vmem:[#allocation10 + $0xc0] sm:$0xff]
    %v482 = vld [vmem:[#allocation10 + $0xc8] sm:$0xff]
    %v483 = vld [vmem:[#allocation10 + $0xd0] sm:$0xff]
    %v484 = vld [vmem:[#allocation10 + $0xd8] sm:$0xff]
    %v485 = vld [vmem:[#allocation10 + $0xe0] sm:$0xff]
    %v486 = vld [vmem:[#allocation10 + $0xe8] sm:$0xff]
    %v487 = vld [vmem:[#allocation10 + $0xf0] sm:$0xff]
    %v488 = vld [vmem:[#allocation10 + $0xf8] sm:$0xff]
    %v489 = vld [vmem:[%s7] sm:$0x3]
    %v491 = vperm.slane %v489, 0
    %v492 = vperm.slane %v489, 1
    %v527 = vunpack.c.l.b16 %v457
    %v528 = vunpack.c.h.b16 %v457
    %v529 = vunpack.c.l.b16 %v458
    %v530 = vunpack.c.h.b16 %v458
    %v531 = vunpack.c.l.b16 %v459
    %v532 = vunpack.c.h.b16 %v459
    %v533 = vunpack.c.l.b16 %v460
    %v534 = vunpack.c.h.b16 %v460
    %v535 = vunpack.c.l.b16 %v461
    %v536 = vunpack.c.h.b16 %v461
    %v537 = vunpack.c.l.b16 %v462
    %v538 = vunpack.c.h.b16 %v462
    %v539 = vunpack.c.l.b16 %v463
    %v540 = vunpack.c.h.b16 %v463
    %v541 = vunpack.c.l.b16 %v464
    %v542 = vunpack.c.h.b16 %v464
    %v543 = vunpack.c.l.b16 %v465
    %v544 = vunpack.c.h.b16 %v465
    %v545 = vunpack.c.l.b16 %v466
    %v546 = vunpack.c.h.b16 %v466
    %v547 = vunpack.c.l.b16 %v467
    %v548 = vunpack.c.h.b16 %v467
    %v549 = vunpack.c.l.b16 %v468
    %v550 = vunpack.c.h.b16 %v468
    %v551 = vunpack.c.l.b16 %v469
    %v552 = vunpack.c.h.b16 %v469
    %v553 = vunpack.c.l.b16 %v470
    %v554 = vunpack.c.h.b16 %v470
    %v555 = vunpack.c.l.b16 %v471
    %v556 = vunpack.c.h.b16 %v471
    %v557 = vunpack.c.l.b16 %v472
    %v558 = vunpack.c.h.b16 %v472
    %v559 = vunpack.c.l.b16 %v473
    %v560 = vunpack.c.h.b16 %v473
    %v561 = vunpack.c.l.b16 %v474
    %v562 = vunpack.c.h.b16 %v474
    %v563 = vunpack.c.l.b16 %v475
    %v564 = vunpack.c.h.b16 %v475
    %v565 = vunpack.c.l.b16 %v476
    %v566 = vunpack.c.h.b16 %v476
    %v567 = vunpack.c.l.b16 %v477
    %v568 = vunpack.c.h.b16 %v477
    %v569 = vunpack.c.l.b16 %v478
    %v570 = vunpack.c.h.b16 %v478
    %v571 = vunpack.c.l.b16 %v479
    %v572 = vunpack.c.h.b16 %v479
    %v573 = vunpack.c.l.b16 %v480
    %v574 = vunpack.c.h.b16 %v480
    %v575 = vunpack.c.l.b16 %v481
    %v576 = vunpack.c.h.b16 %v481
    %v577 = vunpack.c.l.b16 %v482
    %v578 = vunpack.c.h.b16 %v482
    %v579 = vunpack.c.l.b16 %v483
    %v580 = vunpack.c.h.b16 %v483
    %v581 = vunpack.c.l.b16 %v484
    %v582 = vunpack.c.h.b16 %v484
    %v583 = vunpack.c.l.b16 %v485
    %v584 = vunpack.c.h.b16 %v485
    %v585 = vunpack.c.l.b16 %v486
    %v586 = vunpack.c.h.b16 %v486
    %v587 = vunpack.c.l.b16 %v487
    %v588 = vunpack.c.h.b16 %v487
    %v589 = vunpack.c.l.b16 %v488
    %v590 = vunpack.c.h.b16 %v488
    %v591 = vpack.c.b16 %v529, %v527
    %v592 = vpack.c.b16 %v530, %v528
    %v593 = vpack.c.b16 %v533, %v531
    %v594 = vpack.c.b16 %v534, %v532
    %v595 = vpack.c.b16 %v537, %v535
    %v596 = vpack.c.b16 %v538, %v536
    %v597 = vpack.c.b16 %v541, %v539
    %v598 = vpack.c.b16 %v542, %v540
    %v599 = vpack.c.b16 %v545, %v543
    %v600 = vpack.c.b16 %v546, %v544
    %v601 = vpack.c.b16 %v549, %v547
    %v602 = vpack.c.b16 %v550, %v548
    %v603 = vpack.c.b16 %v553, %v551
    %v604 = vpack.c.b16 %v554, %v552
    %v605 = vpack.c.b16 %v557, %v555
    %v606 = vpack.c.b16 %v558, %v556
    %v607 = vpack.c.b16 %v561, %v559
    %v608 = vpack.c.b16 %v562, %v560
    %v609 = vpack.c.b16 %v565, %v563
    %v610 = vpack.c.b16 %v566, %v564
    %v611 = vpack.c.b16 %v569, %v567
    %v612 = vpack.c.b16 %v570, %v568
    %v613 = vpack.c.b16 %v573, %v571
    %v614 = vpack.c.b16 %v574, %v572
    %v615 = vpack.c.b16 %v577, %v575
    %v616 = vpack.c.b16 %v578, %v576
    %v617 = vpack.c.b16 %v581, %v579
    %v618 = vpack.c.b16 %v582, %v580
    %v619 = vpack.c.b16 %v585, %v583
    %v620 = vpack.c.b16 %v586, %v584
    %v621 = vpack.c.b16 %v589, %v587
    %v622 = vpack.c.b16 %v590, %v588
    %655 = vmatpush.bf16.msra.mxu0 %v605
    %656 = vmatpush.bf16.msra.mxu0 %v603
    %657 = vmatpush.bf16.msra.mxu0 %v601
    %658 = vmatpush.bf16.msra.mxu0 %v599
    %659 = vmatpush.bf16.msra.mxu0 %v597
    %660 = vmatpush.bf16.msra.mxu0 %v595
    %661 = vmatpush.bf16.msra.mxu0 %v593
    %662 = vmatpush.bf16.msra.mxu0 %v591
    %663 = vmatmul.bf16.gmra.mxu0 %v455
    %v664 = vpop.f32.mrf.mxu0
    %v665 = vadd.f32 %v491, %v664
    %v666 = vpop.f32.mrf.mxu0
    %667 = vdwg.mxu0
    %668 = vmatpush.bf16.msra.mxu0 %v621
    %669 = vmatpush.bf16.msra.mxu0 %v619
    %670 = vmatpush.bf16.msra.mxu0 %v617
    %671 = vmatpush.bf16.msra.mxu0 %v615
    %672 = vmatpush.bf16.msra.mxu0 %v613
    %673 = vmatpush.bf16.msra.mxu0 %v611
    %674 = vmatpush.bf16.msra.mxu0 %v609
    %675 = vmatpush.bf16.msra.mxu0 %v607
    %676 = vmatmul.bf16.gmra.mxu0 %v456
    %v677 = vpop.f32.mrf.mxu0
    %v678 = vadd.f32 %v665, %v677
    %v679 = vpop.f32.mrf.mxu0
    %680 = vdwg.mxu0
    %681 = vmatpush.bf16.msra.mxu0 %v606
    %682 = vmatpush.bf16.msra.mxu0 %v604
    %683 = vmatpush.bf16.msra.mxu0 %v602
    %684 = vmatpush.bf16.msra.mxu0 %v600
    %685 = vmatpush.bf16.msra.mxu0 %v598
    %686 = vmatpush.bf16.msra.mxu0 %v596
    %687 = vmatpush.bf16.msra.mxu0 %v594
    %688 = vmatpush.bf16.msra.mxu0 %v592
    %689 = vmatmul.bf16.gmra.mxu0 %v455
    %v690 = vpop.f32.mrf.mxu0
    %v691 = vadd.f32 %v492, %v690
    %v692 = vpop.f32.mrf.mxu0
    %693 = vdwg.mxu0
    %694 = vmatpush.bf16.msra.mxu0 %v622
    %695 = vmatpush.bf16.msra.mxu0 %v620
    %696 = vmatpush.bf16.msra.mxu0 %v618
    %697 = vmatpush.bf16.msra.mxu0 %v616
    %698 = vmatpush.bf16.msra.mxu0 %v614
    %699 = vmatpush.bf16.msra.mxu0 %v612
    %700 = vmatpush.bf16.msra.mxu0 %v610
    %701 = vmatpush.bf16.msra.mxu0 %v608
    %702 = vmatmul.bf16.gmra.mxu0 %v456
    %v703 = vpop.f32.mrf.mxu0
    %v704 = vadd.f32 %v691, %v703
    %v705 = vpop.f32.mrf.mxu0
    %706 = vdwg.mxu0
    %v707 = vmax.f32 %v678, 0.0
    %v708 = vmax.f32 %v704, 0.0
    %v709 = vpack.c.bf16 %v707, %v707
    %v710 = vpack.c.bf16 %v708, %v708
    %v711 = vld [vmem:[#allocation11] sm:$0xf]
    %v712 = vld [vmem:[#allocation11 + $0x4] sm:$0xf]
    %v713 = vld [vmem:[#allocation11 + $0x8] sm:$0xf]
    %v714 = vld [vmem:[#allocation11 + $0xc] sm:$0xf]
    %v715 = vld [vmem:[#allocation11 + $0x10] sm:$0xf]
    %v716 = vld [vmem:[#allocation11 + $0x14] sm:$0xf]
    %v717 = vld [vmem:[#allocation11 + $0x18] sm:$0xf]
    %v718 = vld [vmem:[#allocation11 + $0x1c] sm:$0xf]
    %v719 = vld [vmem:[#allocation11 + $0x20] sm:$0xf]
    %v720 = vld [vmem:[#allocation11 + $0x24] sm:$0xf]
    %v721 = vld [vmem:[#allocation11 + $0x28] sm:$0xf]
    %v722 = vld [vmem:[#allocation11 + $0x2c] sm:$0xf]
    %v723 = vld [vmem:[#allocation11 + $0x30] sm:$0xf]
    %v724 = vld [vmem:[#allocation11 + $0x34] sm:$0xf]
    %v725 = vld [vmem:[#allocation11 + $0x38] sm:$0xf]
    %v726 = vld [vmem:[#allocation11 + $0x3c] sm:$0xf]
    %v727 = vld [vmem:[#allocation11 + $0x40] sm:$0xf]
    %v728 = vld [vmem:[#allocation11 + $0x44] sm:$0xf]
    %v729 = vld [vmem:[#allocation11 + $0x48] sm:$0xf]
    %v730 = vld [vmem:[#allocation11 + $0x4c] sm:$0xf]
    %v731 = vld [vmem:[#allocation11 + $0x50] sm:$0xf]
    %v732 = vld [vmem:[#allocation11 + $0x54] sm:$0xf]
    %v733 = vld [vmem:[#allocation11 + $0x58] sm:$0xf]
    %v734 = vld [vmem:[#allocation11 + $0x5c] sm:$0xf]
    %v735 = vld [vmem:[#allocation11 + $0x60] sm:$0xf]
    %v736 = vld [vmem:[#allocation11 + $0x64] sm:$0xf]
    %v737 = vld [vmem:[#allocation11 + $0x68] sm:$0xf]
    %v738 = vld [vmem:[#allocation11 + $0x6c] sm:$0xf]
    %v739 = vld [vmem:[#allocation11 + $0x70] sm:$0xf]
    %v740 = vld [vmem:[#allocation11 + $0x74] sm:$0xf]
    %v741 = vld [vmem:[#allocation11 + $0x78] sm:$0xf]
    %v742 = vld [vmem:[#allocation11 + $0x7c] sm:$0xf]
    %v743 = vld [vmem:[%s9] sm:$0x1]
    %v745 = vperm.slane %v743, 0
    %v779 = vunpack.c.l.b16 %v711
    %v780 = vunpack.c.l.b16 %v712
    %v781 = vunpack.c.l.b16 %v713
    %v782 = vunpack.c.l.b16 %v714
    %v783 = vunpack.c.l.b16 %v715
    %v784 = vunpack.c.l.b16 %v716
    %v785 = vunpack.c.l.b16 %v717
    %v786 = vunpack.c.l.b16 %v718
    %v787 = vunpack.c.l.b16 %v719
    %v788 = vunpack.c.l.b16 %v720
    %v789 = vunpack.c.l.b16 %v721
    %v790 = vunpack.c.l.b16 %v722
    %v791 = vunpack.c.l.b16 %v723
    %v792 = vunpack.c.l.b16 %v724
    %v793 = vunpack.c.l.b16 %v725
    %v794 = vunpack.c.l.b16 %v726
    %v795 = vunpack.c.l.b16 %v727
    %v796 = vunpack.c.l.b16 %v728
    %v797 = vunpack.c.l.b16 %v729
    %v798 = vunpack.c.l.b16 %v730
    %v799 = vunpack.c.l.b16 %v731
    %v800 = vunpack.c.l.b16 %v732
    %v801 = vunpack.c.l.b16 %v733
    %v802 = vunpack.c.l.b16 %v734
    %v803 = vunpack.c.l.b16 %v735
    %v804 = vunpack.c.l.b16 %v736
    %v805 = vunpack.c.l.b16 %v737
    %v806 = vunpack.c.l.b16 %v738
    %v807 = vunpack.c.l.b16 %v739
    %v808 = vunpack.c.l.b16 %v740
    %v809 = vunpack.c.l.b16 %v741
    %v810 = vunpack.c.l.b16 %v742
    %v811 = vpack.c.b16 %v780, %v779
    %v812 = vpack.c.b16 %v782, %v781
    %v813 = vpack.c.b16 %v784, %v783
    %v814 = vpack.c.b16 %v786, %v785
    %v815 = vpack.c.b16 %v788, %v787
    %v816 = vpack.c.b16 %v790, %v789
    %v817 = vpack.c.b16 %v792, %v791
    %v818 = vpack.c.b16 %v794, %v793
    %v819 = vpack.c.b16 %v796, %v795
    %v820 = vpack.c.b16 %v798, %v797
    %v821 = vpack.c.b16 %v800, %v799
    %v822 = vpack.c.b16 %v802, %v801
    %v823 = vpack.c.b16 %v804, %v803
    %v824 = vpack.c.b16 %v806, %v805
    %v825 = vpack.c.b16 %v808, %v807
    %v826 = vpack.c.b16 %v810, %v809
    %843 = vmatpush.bf16.msra.mxu0 %v818
    %844 = vmatpush.bf16.msra.mxu0 %v817
    %845 = vmatpush.bf16.msra.mxu0 %v816
    %846 = vmatpush.bf16.msra.mxu0 %v815
    %847 = vmatpush.bf16.msra.mxu0 %v814
    %848 = vmatpush.bf16.msra.mxu0 %v813
    %849 = vmatpush.bf16.msra.mxu0 %v812
    %850 = vmatpush.bf16.msra.mxu0 %v811
    %851 = vmatmul.bf16.gmra.mxu0 %v709
    %v852 = vpop.f32.mrf.mxu0
    %v853 = vadd.f32 %v745, %v852
    %v854 = vpop.f32.mrf.mxu0
    %855 = vdwg.mxu0
    %856 = vmatpush.bf16.msra.mxu0 %v826
    %857 = vmatpush.bf16.msra.mxu0 %v825
    %858 = vmatpush.bf16.msra.mxu0 %v824
    %859 = vmatpush.bf16.msra.mxu0 %v823
    %860 = vmatpush.bf16.msra.mxu0 %v822
    %861 = vmatpush.bf16.msra.mxu0 %v821
    %862 = vmatpush.bf16.msra.mxu0 %v820
    %863 = vmatpush.bf16.msra.mxu0 %v819
    %864 = vmatmul.bf16.gmra.mxu0 %v710
    %v865 = vpop.f32.mrf.mxu0
    %v866 = vadd.f32 %v853, %v865
    %v867 = vpop.f32.mrf.mxu0
    %868 = vdwg.mxu0
    %v869 = vtanh.pop %v866
    %v870 = vmul.f32 %v869, 2.0
    %vm871 = vcmask 25600
    %872 = vst.msk [vmem:[#allocation13] sm:$0x3] %vm871, %v870
    // Predicated region
    $region66: #{tpu_custom_call.1} parent=1 // pred_check
      _
    $region67: #{tpu_custom_call.1} parent=1 // pred_check_branch
      %874 = sbr.rel (0) target = $region69
    $region68: #{tpu_custom_call.1} parent=1 // pred_region
      %876 = vsyncadd [#allocation4], 0
      %s878 = sshll.u32 [#allocation13], 4
      %s879 = int_to_ptr.vmem [resolvable:$true] %s878
      %s880 = sshll.u32 %s10, 4
      %s881 = int_to_ptr.hbm [resolvable:$true] %s880
      %883 = dma.vmem_to_hbm [thread:$0]  %s879, 32, %s881, [#allocation4]
    $region69: #{tpu_custom_call.1} parent=1 // pred_fallthru
      _
    // Predicated region
    $region70: #{tpu_custom_call.1} parent=1 // pred_check
      _
    $region71: #{tpu_custom_call.1} parent=1 // pred_check_branch
      %885 = sbr.rel (0) target = $region73
    $region72: #{tpu_custom_call.1} parent=1 // pred_region
      %887 = dma.done [#allocation4], 32
    $region73: #{tpu_custom_call.1} parent=1 // pred_fallthru
      _
    %888 = vsyncpa [#allocation3], 1
    %889 = vsyncpa [#allocation6], 1
    %890 = vsyncpa [#allocation9], 1
    %891 = vsyncpa [#allocation12], 1
    %892 = vsyncpa [#allocation4], 1

// kernel: tpu_custom_call.1
$region0: #{tpu_custom_call.1}
  #allocation0 [shape = 'u32[]', space=smem, size = 0x4, offset = 0x4, fixed_abs, tag = 'smem constant byte address 0x4 - core index']
  #allocation1 [shape = 'u32[72,128]{1,0:T(1,128)}', space=vmem, size = 0x9000, scoped, tag = 'internal scratch']
  %s0 = inlined_call_operand.hbm [shape: bf16[2,16], index: 0, kind: input, shape index: {}]
  %s1 = inlined_call_operand.hbm [shape: bf16[2,8], index: 1, kind: input, shape index: {}]
  %s2 = inlined_call_operand.hbm [shape: bf16[24,256], index: 2, kind: input, shape index: {}]
  %s3 = inlined_call_operand.vmem [shape: f32[1,256], index: 3, kind: input, shape index: {}]
  %s4 = inlined_call_operand.hbm [shape: bf16[256,256], index: 4, kind: input, shape index: {}]
  %s5 = inlined_call_operand.vmem [shape: f32[1,256], index: 5, kind: input, shape index: {}]
  %s6 = inlined_call_operand.hbm [shape: bf16[256,256], index: 6, kind: input, shape index: {}]
  %s7 = inlined_call_operand.vmem [shape: f32[1,256], index: 7, kind: input, shape index: {}]
  %s8 = inlined_call_operand.hbm [shape: bf16[256,128], index: 8, kind: input, shape index: {}]
  %s9 = inlined_call_operand.vmem [shape: f32[1,128], index: 9, kind: input, shape index: {}]
  %s10 = inlined_call_operand.hbm [shape: f32[2,4], index: 10, kind: output, shape index: {}]
  %s11 = sld [smem:[#allocation0]]
  $region74: #{tpu_custom_call.1} parent=0
    _
  %s13 = ssub.s32 1, %s11
  %s14 = scalar_select 0, %s13, %s11
  $region1: #{tpu_custom_call.1} parent=0
    #allocation2 [shape = 'u8[512]{0}', space=vmem, size = 0x400, scoped, tag = 'input window, operand 0, single buffered']
    #allocation3 [shape = 's32[1]{0}', space=sflag, size = 0x4, scoped, tag = 'scoped memory for tpu_custom_call.1']
    #allocation4 [shape = 's32[1]{0}', space=sflag, size = 0x4, scoped, tag = 'scoped memory for tpu_custom_call.1']
    #allocation5 [shape = 'u8[512]{0}', space=vmem, size = 0x400, scoped, tag = 'input window, operand 1, single buffered']
    #allocation6 [shape = 's32[1]{0}', space=sflag, size = 0x4, scoped, tag = 'scoped memory for tpu_custom_call.1']
    #allocation7 [shape = 'u8[12288]{0}', space=vmem, size = 0x3000, scoped, tag = 'input window, operand 2, single buffered']
    #allocation8 [shape = 'u8[131072]{0}', space=vmem, size = 0x20000, scoped, tag = 'input window, operand 4, single buffered']
    #allocation9 [shape = 's32[1]{0}', space=sflag, size = 0x4, scoped, tag = 'scoped memory for tpu_custom_call.1']
    #allocation10 [shape = 'u8[131072]{0}', space=vmem, size = 0x20000, scoped, tag = 'input window, operand 6, single buffered']
    #allocation11 [shape = 'u8[65536]{0}', space=vmem, size = 0x10000, scoped, tag = 'input window, operand 8, single buffered']
    #allocation12 [shape = 's32[1]{0}', space=sflag, size = 0x4, scoped, tag = 'scoped memory for tpu_custom_call.1']
    #allocation13 [shape = 'u8[1024]{0}', space=vmem, size = 0x400, scoped, tag = 'output window, operand 0, single buffered']
    %15 = vsyncpa [#allocation3], 0
    %16 = vsyncpa [#allocation6], 0
    %17 = vsyncpa [#allocation9], 0
    %18 = vsyncpa [#allocation12], 0
    %19 = vsyncpa [#allocation4], 0
    // Predicated region
    $region2: #{tpu_custom_call.1} parent=1 // pred_check
      _
    $region3: #{tpu_custom_call.1} parent=1 // pred_check_branch
      %21 = sbr.rel (0) target = $region5
    $region4: #{tpu_custom_call.1} parent=1 // pred_region
      %23 = vsyncadd [#allocation3], 0
      %s25 = sshll.u32 %s0, 4
      %s26 = int_to_ptr.hbm [resolvable:$true] %s25
      %s27 = sshll.u32 [#allocation2], 4
      %s28 = int_to_ptr.vmem [resolvable:$true] %s27
      %30 = dma.hbm_to_vmem [thread:$0]  %s26, 16, %s28, [#allocation3]
    $region5: #{tpu_custom_call.1} parent=1 // pred_fallthru
      _
    // Predicated region
    $region6: #{tpu_custom_call.1} parent=1 // pred_check
      _
    $region7: #{tpu_custom_call.1} parent=1 // pred_check_branch
      %32 = sbr.rel (0) target = $region9
    $region8: #{tpu_custom_call.1} parent=1 // pred_region
      %34 = vsyncadd [#allocation6], 0
      %s36 = sshll.u32 %s1, 4
      %s37 = int_to_ptr.hbm [resolvable:$true] %s36
      %s38 = sshll.u32 [#allocation5], 4
      %s39 = int_to_ptr.vmem [resolvable:$true] %s38
      %41 = dma.hbm_to_vmem [thread:$0]  %s37, 16, %s39, [#allocation6]
    $region9: #{tpu_custom_call.1} parent=1 // pred_fallthru
      _
    // Predicated region
    $region10: #{tpu_custom_call.1} parent=1 // pred_check
      _
    $region11: #{tpu_custom_call.1} parent=1 // pred_check_branch
      %43 = sbr.rel (0) target = $region13
    $region12: #{tpu_custom_call.1} parent=1 // pred_region
      %45 = vsyncadd [#allocation6], 0
      %s46 = sshll.u32 %s2, 4
      %s47 = int_to_ptr.hbm [resolvable:$true] %s46
      %s48 = sshll.u32 [#allocation7], 4
      %s49 = int_to_ptr.vmem [resolvable:$true] %s48
      %54 = dma.hbm_to_vmem [thread:$0]  %s47, 384, %s49, [#allocation6], 128, 128, 8
    $region13: #{tpu_custom_call.1} parent=1 // pred_fallthru
      _
    // Predicated region
    $region14: #{tpu_custom_call.1} parent=1 // pred_check
      _
    $region15: #{tpu_custom_call.1} parent=1 // pred_check_branch
      %56 = sbr.rel (0) target = $region17
    $region16: #{tpu_custom_call.1} parent=1 // pred_region
      _
    $region17: #{tpu_custom_call.1} parent=1 // pred_fallthru
      _
    // Predicated region
    $region18: #{tpu_custom_call.1} parent=1 // pred_check
      _
    $region19: #{tpu_custom_call.1} parent=1 // pred_check_branch
      %58 = sbr.rel (0) target = $region21
    $region20: #{tpu_custom_call.1} parent=1 // pred_region
      %60 = vsyncadd [#allocation9], 0
      %s61 = sshll.u32 %s4, 4
      %s62 = int_to_ptr.hbm [resolvable:$true] %s61
      %s63 = sshll.u32 [#allocation8], 4
      %s64 = int_to_ptr.vmem [resolvable:$true] %s63
      %69 = dma.hbm_to_vmem [thread:$0]  %s62, 4096, %s64, [#allocation9], 128, 128, 8
    $region21: #{tpu_custom_call.1} parent=1 // pred_fallthru
      _
    // Predicated region
    $region22: #{tpu_custom_call.1} parent=1 // pred_check
      _
    $region23: #{tpu_custom_call.1} parent=1 // pred_check_branch
      %71 = sbr.rel (0) target = $region25
    $region24: #{tpu_custom_call.1} parent=1 // pred_region
      _
    $region25: #{tpu_custom_call.1} parent=1 // pred_fallthru
      _
    // Predicated region
    $region26: #{tpu_custom_call.1} parent=1 // pred_check
      _
    $region27: #{tpu_custom_call.1} parent=1 // pred_check_branch
      %73 = sbr.rel (0) target = $region29
    $region28: #{tpu_custom_call.1} parent=1 // pred_region
      %75 = vsyncadd [#allocation9], 0
      %s76 = sshll.u32 %s6, 4
      %s77 = int_to_ptr.hbm [resolvable:$true] %s76
      %s78 = sshll.u32 [#allocation10], 4
      %s79 = int_to_ptr.vmem [resolvable:$true] %s78
      %84 = dma.hbm_to_vmem [thread:$0]  %s77, 4096, %s79, [#allocation9], 128, 128, 8
    $region29: #{tpu_custom_call.1} parent=1 // pred_fallthru
      _
    // Predicated region
    $region30: #{tpu_custom_call.1} parent=1 // pred_check
      _
    $region31: #{tpu_custom_call.1} parent=1 // pred_check_branch
      %86 = sbr.rel (0) target = $region33
    $region32: #{tpu_custom_call.1} parent=1 // pred_region
      _
    $region33: #{tpu_custom_call.1} parent=1 // pred_fallthru
      _
    // Predicated region
    $region34: #{tpu_custom_call.1} parent=1 // pred_check
      _
    $region35: #{tpu_custom_call.1} parent=1 // pred_check_branch
      %88 = sbr.rel (0) target = $region37
    $region36: #{tpu_custom_call.1} parent=1 // pred_region
      %90 = vsyncadd [#allocation12], 0
      %s91 = sshll.u32 %s8, 4
      %s92 = int_to_ptr.hbm [resolvable:$true] %s91
      %s93 = sshll.u32 [#allocation11], 4
      %s94 = int_to_ptr.vmem [resolvable:$true] %s93
      %99 = dma.hbm_to_vmem [thread:$0]  %s92, 2048, %s94, [#allocation12], 64, 64, 4
    $region37: #{tpu_custom_call.1} parent=1 // pred_fallthru
      _
    // Predicated region
    $region38: #{tpu_custom_call.1} parent=1 // pred_check
      _
    $region39: #{tpu_custom_call.1} parent=1 // pred_check_branch
      %101 = sbr.rel (0) target = $region41
    $region40: #{tpu_custom_call.1} parent=1 // pred_region
      _
    $region41: #{tpu_custom_call.1} parent=1 // pred_fallthru
      _
    // Predicated region
    $region42: #{tpu_custom_call.1} parent=1 // pred_check
      _
    $region43: #{tpu_custom_call.1} parent=1 // pred_check_branch
      %103 = sbr.rel (0) target = $region45
    $region44: #{tpu_custom_call.1} parent=1 // pred_region
      %105 = dma.done [#allocation3], 16
    $region45: #{tpu_custom_call.1} parent=1 // pred_fallthru
      _
    // Predicated region
    $region46: #{tpu_custom_call.1} parent=1 // pred_check
      _
    $region47: #{tpu_custom_call.1} parent=1 // pred_check_branch
      %107 = sbr.rel (0) target = $region49
    $region48: #{tpu_custom_call.1} parent=1 // pred_region
      %109 = dma.done [#allocation6], 16
    $region49: #{tpu_custom_call.1} parent=1 // pred_fallthru
      _
    // Predicated region
    $region50: #{tpu_custom_call.1} parent=1 // pred_check
      _
    $region51: #{tpu_custom_call.1} parent=1 // pred_check_branch
      %111 = sbr.rel (0) target = $region53
    $region52: #{tpu_custom_call.1} parent=1 // pred_region
      %113 = dma.done [#allocation6], 384
    $region53: #{tpu_custom_call.1} parent=1 // pred_fallthru
      _
    // Predicated region
    $region54: #{tpu_custom_call.1} parent=1 // pred_check
      _
    $region55: #{tpu_custom_call.1} parent=1 // pred_check_branch
      %115 = sbr.rel (0) target = $region57
    $region56: #{tpu_custom_call.1} parent=1 // pred_region
      %117 = dma.done [#allocation9], 4096
    $region57: #{tpu_custom_call.1} parent=1 // pred_fallthru
      _
    // Predicated region
    $region58: #{tpu_custom_call.1} parent=1 // pred_check
      _
    $region59: #{tpu_custom_call.1} parent=1 // pred_check_branch
      %119 = sbr.rel (0) target = $region61
    $region60: #{tpu_custom_call.1} parent=1 // pred_region
      %121 = dma.done [#allocation9], 4096
    $region61: #{tpu_custom_call.1} parent=1 // pred_fallthru
      _
    // Predicated region
    $region62: #{tpu_custom_call.1} parent=1 // pred_check
      _
    $region63: #{tpu_custom_call.1} parent=1 // pred_check_branch
      %123 = sbr.rel (0) target = $region65
    $region64: #{tpu_custom_call.1} parent=1 // pred_region
      %125 = dma.done [#allocation12], 2048
    $region65: #{tpu_custom_call.1} parent=1 // pred_fallthru
      _
    %v127 = vld [vmem:[#allocation2] sm:$0x1]
    %v128 = vld [vmem:[#allocation5] sm:$0x1]
    %130 = vst [vmem:[#allocation1] ss:$9 sm:$0xff] %v128
    %v131 = vld [vmem:[#allocation1] sm:$0xff]
    %133 = vrot.lane.b32.xlu0 %v131, 16
    %v134 = vpop.permute.xlu0 %133
    %vm135 = vcmask 130048
    %v138 = vsel %vm135, %v127, %v134
    %v139 = vld [vmem:[#allocation7] sm:$0xff]
    %v140 = vld [vmem:[#allocation7 + $0x8] sm:$0xff]
    %v141 = vld [vmem:[#allocation7 + $0x10] sm:$0xff]
    %v142 = vld [vmem:[%s3] sm:$0x3]
    %v144 = vperm.slane %v142, 0
    %v145 = vperm.slane %v142, 1
    %v151 = vunpack.c.l.b16 %v139
    %v152 = vunpack.c.h.b16 %v139
    %v153 = vunpack.c.l.b16 %v140
    %v154 = vunpack.c.h.b16 %v140
    %v155 = vunpack.c.l.b16 %v141
    %v156 = vunpack.c.h.b16 %v141
    %v157 = vpack.c.b16 %v153, %v151
    %v158 = vpack.c.b16 %v154, %v152
    %v159 = vpack.c.b16 %v155, %v155
    %v160 = vpack.c.b16 %v156, %v156
    %vm163 = vcmask 195584
    %v164 = vsel %vm163, %v138, 0
    %vm166 = vcmask 1043456
    %v168 = vsel %vm166, %v159, 0
    %v171 = vsel %vm166, %v160, 0
    %173 = vmatpush.bf16.msra.mxu0 0
    %174 = vmatpush.bf16.msra.mxu0 0
    %175 = vmatpush.bf16.msra.mxu0 0
    %176 = vmatpush.bf16.msra.mxu0 0
    %177 = vmatpush.bf16.msra.mxu0 0
    %178 = vmatpush.bf16.msra.mxu0 0
    %179 = vmatpush.bf16.msra.mxu0 %v168
    %180 = vmatpush.bf16.msra.mxu0 %v157
    %181 = vmatmul.bf16.gmra.mxu0 %v164
    %v182 = vpop.f32.mrf.mxu0
    %v183 = vadd.f32 %v144, %v182
    %v184 = vpop.f32.mrf.mxu0
    %185 = vdwg.mxu0
    %186 = vmatpush.bf16.msra.mxu0 0
    %187 = vmatpush.bf16.msra.mxu0 0
    %188 = vmatpush.bf16.msra.mxu0 0
    %189 = vmatpush.bf16.msra.mxu0 0
    %190 = vmatpush.bf16.msra.mxu0 0
    %191 = vmatpush.bf16.msra.mxu0 0
    %192 = vmatpush.bf16.msra.mxu0 %v171
    %193 = vmatpush.bf16.msra.mxu0 %v158
    %194 = vmatmul.bf16.gmra.mxu0 %v164
    %v195 = vpop.f32.mrf.mxu0
    %v196 = vadd.f32 %v145, %v195
    %v197 = vpop.f32.mrf.mxu0
    %198 = vdwg.mxu0
    %v199 = vmax.f32 %v183, 0.0
    %v200 = vmax.f32 %v196, 0.0
    %v201 = vpack.c.bf16 %v199, %v199
    %v202 = vpack.c.bf16 %v200, %v200
    %v203 = vld [vmem:[#allocation8] sm:$0xff]
    %v204 = vld [vmem:[#allocation8 + $0x8] sm:$0xff]
    %v205 = vld [vmem:[#allocation8 + $0x10] sm:$0xff]
    %v206 = vld [vmem:[#allocation8 + $0x18] sm:$0xff]
    %v207 = vld [vmem:[#allocation8 + $0x20] sm:$0xff]
    %v208 = vld [vmem:[#allocation8 + $0x28] sm:$0xff]
    %v209 = vld [vmem:[#allocation8 + $0x30] sm:$0xff]
    %v210 = vld [vmem:[#allocation8 + $0x38] sm:$0xff]
    %v211 = vld [vmem:[#allocation8 + $0x40] sm:$0xff]
    %v212 = vld [vmem:[#allocation8 + $0x48] sm:$0xff]
    %v213 = vld [vmem:[#allocation8 + $0x50] sm:$0xff]
    %v214 = vld [vmem:[#allocation8 + $0x58] sm:$0xff]
    %v215 = vld [vmem:[#allocation8 + $0x60] sm:$0xff]
    %v216 = vld [vmem:[#allocation8 + $0x68] sm:$0xff]
    %v217 = vld [vmem:[#allocation8 + $0x70] sm:$0xff]
    %v218 = vld [vmem:[#allocation8 + $0x78] sm:$0xff]
    %v219 = vld [vmem:[#allocation8 + $0x80] sm:$0xff]
    %v220 = vld [vmem:[#allocation8 + $0x88] sm:$0xff]
    %v221 = vld [vmem:[#allocation8 + $0x90] sm:$0xff]
    %v222 = vld [vmem:[#allocation8 + $0x98] sm:$0xff]
    %v223 = vld [vmem:[#allocation8 + $0xa0] sm:$0xff]
    %v224 = vld [vmem:[#allocation8 + $0xa8] sm:$0xff]
    %v225 = vld [vmem:[#allocation8 + $0xb0] sm:$0xff]
    %v226 = vld [vmem:[#allocation8 + $0xb8] sm:$0xff]
    %v227 = vld [vmem:[#allocation8 + $0xc0] sm:$0xff]
    %v228 = vld [vmem:[#allocation8 + $0xc8] sm:$0xff]
    %v229 = vld [vmem:[#allocation8 + $0xd0] sm:$0xff]
    %v230 = vld [vmem:[#allocation8 + $0xd8] sm:$0xff]
    %v231 = vld [vmem:[#allocation8 + $0xe0] sm:$0xff]
    %v232 = vld [vmem:[#allocation8 + $0xe8] sm:$0xff]
    %v233 = vld [vmem:[#allocation8 + $0xf0] sm:$0xff]
    %v234 = vld [vmem:[#allocation8 + $0xf8] sm:$0xff]
    %v235 = vld [vmem:[%s5] sm:$0x3]
    %v237 = vperm.slane %v235, 0
    %v238 = vperm.slane %v235, 1
    %v273 = vunpack.c.l.b16 %v203
    %v274 = vunpack.c.h.b16 %v203
    %v275 = vunpack.c.l.b16 %v204
    %v276 = vunpack.c.h.b16 %v204
    %v277 = vunpack.c.l.b16 %v205
    %v278 = vunpack.c.h.b16 %v205
    %v279 = vunpack.c.l.b16 %v206
    %v280 = vunpack.c.h.b16 %v206
    %v281 = vunpack.c.l.b16 %v207
    %v282 = vunpack.c.h.b16 %v207
    %v283 = vunpack.c.l.b16 %v208
    %v284 = vunpack.c.h.b16 %v208
    %v285 = vunpack.c.l.b16 %v209
    %v286 = vunpack.c.h.b16 %v209
    %v287 = vunpack.c.l.b16 %v210
    %v288 = vunpack.c.h.b16 %v210
    %v289 = vunpack.c.l.b16 %v211
    %v290 = vunpack.c.h.b16 %v211
    %v291 = vunpack.c.l.b16 %v212
    %v292 = vunpack.c.h.b16 %v212
    %v293 = vunpack.c.l.b16 %v213
    %v294 = vunpack.c.h.b16 %v213
    %v295 = vunpack.c.l.b16 %v214
    %v296 = vunpack.c.h.b16 %v214
    %v297 = vunpack.c.l.b16 %v215
    %v298 = vunpack.c.h.b16 %v215
    %v299 = vunpack.c.l.b16 %v216
    %v300 = vunpack.c.h.b16 %v216
    %v301 = vunpack.c.l.b16 %v217
    %v302 = vunpack.c.h.b16 %v217
    %v303 = vunpack.c.l.b16 %v218
    %v304 = vunpack.c.h.b16 %v218
    %v305 = vunpack.c.l.b16 %v219
    %v306 = vunpack.c.h.b16 %v219
    %v307 = vunpack.c.l.b16 %v220
    %v308 = vunpack.c.h.b16 %v220
    %v309 = vunpack.c.l.b16 %v221
    %v310 = vunpack.c.h.b16 %v221
    %v311 = vunpack.c.l.b16 %v222
    %v312 = vunpack.c.h.b16 %v222
    %v313 = vunpack.c.l.b16 %v223
    %v314 = vunpack.c.h.b16 %v223
    %v315 = vunpack.c.l.b16 %v224
    %v316 = vunpack.c.h.b16 %v224
    %v317 = vunpack.c.l.b16 %v225
    %v318 = vunpack.c.h.b16 %v225
    %v319 = vunpack.c.l.b16 %v226
    %v320 = vunpack.c.h.b16 %v226
    %v321 = vunpack.c.l.b16 %v227
    %v322 = vunpack.c.h.b16 %v227
    %v323 = vunpack.c.l.b16 %v228
    %v324 = vunpack.c.h.b16 %v228
    %v325 = vunpack.c.l.b16 %v229
    %v326 = vunpack.c.h.b16 %v229
    %v327 = vunpack.c.l.b16 %v230
    %v328 = vunpack.c.h.b16 %v230
    %v329 = vunpack.c.l.b16 %v231
    %v330 = vunpack.c.h.b16 %v231
    %v331 = vunpack.c.l.b16 %v232
    %v332 = vunpack.c.h.b16 %v232
    %v333 = vunpack.c.l.b16 %v233
    %v334 = vunpack.c.h.b16 %v233
    %v335 = vunpack.c.l.b16 %v234
    %v336 = vunpack.c.h.b16 %v234
    %v337 = vpack.c.b16 %v275, %v273
    %v338 = vpack.c.b16 %v276, %v274
    %v339 = vpack.c.b16 %v279, %v277
    %v340 = vpack.c.b16 %v280, %v278
    %v341 = vpack.c.b16 %v283, %v281
    %v342 = vpack.c.b16 %v284, %v282
    %v343 = vpack.c.b16 %v287, %v285
    %v344 = vpack.c.b16 %v288, %v286
    %v345 = vpack.c.b16 %v291, %v289
    %v346 = vpack.c.b16 %v292, %v290
    %v347 = vpack.c.b16 %v295, %v293
    %v348 = vpack.c.b16 %v296, %v294
    %v349 = vpack.c.b16 %v299, %v297
    %v350 = vpack.c.b16 %v300, %v298
    %v351 = vpack.c.b16 %v303, %v301
    %v352 = vpack.c.b16 %v304, %v302
    %v353 = vpack.c.b16 %v307, %v305
    %v354 = vpack.c.b16 %v308, %v306
    %v355 = vpack.c.b16 %v311, %v309
    %v356 = vpack.c.b16 %v312, %v310
    %v357 = vpack.c.b16 %v315, %v313
    %v358 = vpack.c.b16 %v316, %v314
    %v359 = vpack.c.b16 %v319, %v317
    %v360 = vpack.c.b16 %v320, %v318
    %v361 = vpack.c.b16 %v323, %v321
    %v362 = vpack.c.b16 %v324, %v322
    %v363 = vpack.c.b16 %v327, %v325
    %v364 = vpack.c.b16 %v328, %v326
    %v365 = vpack.c.b16 %v331, %v329
    %v366 = vpack.c.b16 %v332, %v330
    %v367 = vpack.c.b16 %v335, %v333
    %v368 = vpack.c.b16 %v336, %v334
    %401 = vmatpush.bf16.msra.mxu0 %v351
    %402 = vmatpush.bf16.msra.mxu0 %v349
    %403 = vmatpush.bf16.msra.mxu0 %v347
    %404 = vmatpush.bf16.msra.mxu0 %v345
    %405 = vmatpush.bf16.msra.mxu0 %v343
    %406 = vmatpush.bf16.msra.mxu0 %v341
    %407 = vmatpush.bf16.msra.mxu0 %v339
    %408 = vmatpush.bf16.msra.mxu0 %v337
    %409 = vmatmul.bf16.gmra.mxu0 %v201
    %v410 = vpop.f32.mrf.mxu0
    %v411 = vadd.f32 %v237, %v410
    %v412 = vpop.f32.mrf.mxu0
    %413 = vdwg.mxu0
    %414 = vmatpush.bf16.msra.mxu0 %v367
    %415 = vmatpush.bf16.msra.mxu0 %v365
    %416 = vmatpush.bf16.msra.mxu0 %v363
    %417 = vmatpush.bf16.msra.mxu0 %v361
    %418 = vmatpush.bf16.msra.mxu0 %v359
    %419 = vmatpush.bf16.msra.mxu0 %v357
    %420 = vmatpush.bf16.msra.mxu0 %v355
    %421 = vmatpush.bf16.msra.mxu0 %v353
    %422 = vmatmul.bf16.gmra.mxu0 %v202
    %v423 = vpop.f32.mrf.mxu0
    %v424 = vadd.f32 %v411, %v423
    %v425 = vpop.f32.mrf.mxu0
    %426 = vdwg.mxu0
    %427 = vmatpush.bf16.msra.mxu0 %v352
    %428 = vmatpush.bf16.msra.mxu0 %v350
    %429 = vmatpush.bf16.msra.mxu0 %v348
    %430 = vmatpush.bf16.msra.mxu0 %v346
    %431 = vmatpush.bf16.msra.mxu0 %v344
    %432 = vmatpush.bf16.msra.mxu0 %v342
    %433 = vmatpush.bf16.msra.mxu0 %v340
    %434 = vmatpush.bf16.msra.mxu0 %v338
    %435 = vmatmul.bf16.gmra.mxu0 %v201
    %v436 = vpop.f32.mrf.mxu0
    %v437 = vadd.f32 %v238, %v436
    %v438 = vpop.f32.mrf.mxu0
    %439 = vdwg.mxu0
    %440 = vmatpush.bf16.msra.mxu0 %v368
    %441 = vmatpush.bf16.msra.mxu0 %v366
    %442 = vmatpush.bf16.msra.mxu0 %v364
    %443 = vmatpush.bf16.msra.mxu0 %v362
    %444 = vmatpush.bf16.msra.mxu0 %v360
    %445 = vmatpush.bf16.msra.mxu0 %v358
    %446 = vmatpush.bf16.msra.mxu0 %v356
    %447 = vmatpush.bf16.msra.mxu0 %v354
    %448 = vmatmul.bf16.gmra.mxu0 %v202
    %v449 = vpop.f32.mrf.mxu0
    %v450 = vadd.f32 %v437, %v449
    %v451 = vpop.f32.mrf.mxu0
    %452 = vdwg.mxu0
    %v453 = vmax.f32 %v424, 0.0
    %v454 = vmax.f32 %v450, 0.0
    %v455 = vpack.c.bf16 %v453, %v453
    %v456 = vpack.c.bf16 %v454, %v454
    %v457 = vld [vmem:[#allocation10] sm:$0xff]
    %v458 = vld [vmem:[#allocation10 + $0x8] sm:$0xff]
    %v459 = vld [vmem:[#allocation10 + $0x10] sm:$0xff]
    %v460 = vld [vmem:[#allocation10 + $0x18] sm:$0xff]
    %v461 = vld [vmem:[#allocation10 + $0x20] sm:$0xff]
    %v462 = vld [vmem:[#allocation10 + $0x28] sm:$0xff]
    %v463 = vld [vmem:[#allocation10 + $0x30] sm:$0xff]
    %v464 = vld [vmem:[#allocation10 + $0x38] sm:$0xff]
    %v465 = vld [vmem:[#allocation10 + $0x40] sm:$0xff]
    %v466 = vld [vmem:[#allocation10 + $0x48] sm:$0xff]
    %v467 = vld [vmem:[#allocation10 + $0x50] sm:$0xff]
    %v468 = vld [vmem:[#allocation10 + $0x58] sm:$0xff]
    %v469 = vld [vmem:[#allocation10 + $0x60] sm:$0xff]
    %v470 = vld [vmem:[#allocation10 + $0x68] sm:$0xff]
    %v471 = vld [vmem:[#allocation10 + $0x70] sm:$0xff]
    %v472 = vld [vmem:[#allocation10 + $0x78] sm:$0xff]
    %v473 = vld [vmem:[#allocation10 + $0x80] sm:$0xff]
    %v474 = vld [vmem:[#allocation10 + $0x88] sm:$0xff]
    %v475 = vld [vmem:[#allocation10 + $0x90] sm:$0xff]
    %v476 = vld [vmem:[#allocation10 + $0x98] sm:$0xff]
    %v477 = vld [vmem:[#allocation10 + $0xa0] sm:$0xff]
    %v478 = vld [vmem:[#allocation10 + $0xa8] sm:$0xff]
    %v479 = vld [vmem:[#allocation10 + $0xb0] sm:$0xff]
    %v480 = vld [vmem:[#allocation10 + $0xb8] sm:$0xff]
    %v481 = vld [vmem:[#allocation10 + $0xc0] sm:$0xff]
    %v482 = vld [vmem:[#allocation10 + $0xc8] sm:$0xff]
    %v483 = vld [vmem:[#allocation10 + $0xd0] sm:$0xff]
    %v484 = vld [vmem:[#allocation10 + $0xd8] sm:$0xff]
    %v485 = vld [vmem:[#allocation10 + $0xe0] sm:$0xff]
    %v486 = vld [vmem:[#allocation10 + $0xe8] sm:$0xff]
    %v487 = vld [vmem:[#allocation10 + $0xf0] sm:$0xff]
    %v488 = vld [vmem:[#allocation10 + $0xf8] sm:$0xff]
    %v489 = vld [vmem:[%s7] sm:$0x3]
    %v491 = vperm.slane %v489, 0
    %v492 = vperm.slane %v489, 1
    %v527 = vunpack.c.l.b16 %v457
    %v528 = vunpack.c.h.b16 %v457
    %v529 = vunpack.c.l.b16 %v458
    %v530 = vunpack.c.h.b16 %v458
    %v531 = vunpack.c.l.b16 %v459
    %v532 = vunpack.c.h.b16 %v459
    %v533 = vunpack.c.l.b16 %v460
    %v534 = vunpack.c.h.b16 %v460
    %v535 = vunpack.c.l.b16 %v461
    %v536 = vunpack.c.h.b16 %v461
    %v537 = vunpack.c.l.b16 %v462
    %v538 = vunpack.c.h.b16 %v462
    %v539 = vunpack.c.l.b16 %v463
    %v540 = vunpack.c.h.b16 %v463
    %v541 = vunpack.c.l.b16 %v464
    %v542 = vunpack.c.h.b16 %v464
    %v543 = vunpack.c.l.b16 %v465
    %v544 = vunpack.c.h.b16 %v465
    %v545 = vunpack.c.l.b16 %v466
    %v546 = vunpack.c.h.b16 %v466
    %v547 = vunpack.c.l.b16 %v467
    %v548 = vunpack.c.h.b16 %v467
    %v549 = vunpack.c.l.b16 %v468
    %v550 = vunpack.c.h.b16 %v468
    %v551 = vunpack.c.l.b16 %v469
    %v552 = vunpack.c.h.b16 %v469
    %v553 = vunpack.c.l.b16 %v470
    %v554 = vunpack.c.h.b16 %v470
    %v555 = vunpack.c.l.b16 %v471
    %v556 = vunpack.c.h.b16 %v471
    %v557 = vunpack.c.l.b16 %v472
    %v558 = vunpack.c.h.b16 %v472
    %v559 = vunpack.c.l.b16 %v473
    %v560 = vunpack.c.h.b16 %v473
    %v561 = vunpack.c.l.b16 %v474
    %v562 = vunpack.c.h.b16 %v474
    %v563 = vunpack.c.l.b16 %v475
    %v564 = vunpack.c.h.b16 %v475
    %v565 = vunpack.c.l.b16 %v476
    %v566 = vunpack.c.h.b16 %v476
    %v567 = vunpack.c.l.b16 %v477
    %v568 = vunpack.c.h.b16 %v477
    %v569 = vunpack.c.l.b16 %v478
    %v570 = vunpack.c.h.b16 %v478
    %v571 = vunpack.c.l.b16 %v479
    %v572 = vunpack.c.h.b16 %v479
    %v573 = vunpack.c.l.b16 %v480
    %v574 = vunpack.c.h.b16 %v480
    %v575 = vunpack.c.l.b16 %v481
    %v576 = vunpack.c.h.b16 %v481
    %v577 = vunpack.c.l.b16 %v482
    %v578 = vunpack.c.h.b16 %v482
    %v579 = vunpack.c.l.b16 %v483
    %v580 = vunpack.c.h.b16 %v483
    %v581 = vunpack.c.l.b16 %v484
    %v582 = vunpack.c.h.b16 %v484
    %v583 = vunpack.c.l.b16 %v485
    %v584 = vunpack.c.h.b16 %v485
    %v585 = vunpack.c.l.b16 %v486
    %v586 = vunpack.c.h.b16 %v486
    %v587 = vunpack.c.l.b16 %v487
    %v588 = vunpack.c.h.b16 %v487
    %v589 = vunpack.c.l.b16 %v488
    %v590 = vunpack.c.h.b16 %v488
    %v591 = vpack.c.b16 %v529, %v527
    %v592 = vpack.c.b16 %v530, %v528
    %v593 = vpack.c.b16 %v533, %v531
    %v594 = vpack.c.b16 %v534, %v532
    %v595 = vpack.c.b16 %v537, %v535
    %v596 = vpack.c.b16 %v538, %v536
    %v597 = vpack.c.b16 %v541, %v539
    %v598 = vpack.c.b16 %v542, %v540
    %v599 = vpack.c.b16 %v545, %v543
    %v600 = vpack.c.b16 %v546, %v544
    %v601 = vpack.c.b16 %v549, %v547
    %v602 = vpack.c.b16 %v550, %v548
    %v603 = vpack.c.b16 %v553, %v551
    %v604 = vpack.c.b16 %v554, %v552
    %v605 = vpack.c.b16 %v557, %v555
    %v606 = vpack.c.b16 %v558, %v556
    %v607 = vpack.c.b16 %v561, %v559
    %v608 = vpack.c.b16 %v562, %v560
    %v609 = vpack.c.b16 %v565, %v563
    %v610 = vpack.c.b16 %v566, %v564
    %v611 = vpack.c.b16 %v569, %v567
    %v612 = vpack.c.b16 %v570, %v568
    %v613 = vpack.c.b16 %v573, %v571
    %v614 = vpack.c.b16 %v574, %v572
    %v615 = vpack.c.b16 %v577, %v575
    %v616 = vpack.c.b16 %v578, %v576
    %v617 = vpack.c.b16 %v581, %v579
    %v618 = vpack.c.b16 %v582, %v580
    %v619 = vpack.c.b16 %v585, %v583
    %v620 = vpack.c.b16 %v586, %v584
    %v621 = vpack.c.b16 %v589, %v587
    %v622 = vpack.c.b16 %v590, %v588
    %655 = vmatpush.bf16.msra.mxu0 %v605
    %656 = vmatpush.bf16.msra.mxu0 %v603
    %657 = vmatpush.bf16.msra.mxu0 %v601
    %658 = vmatpush.bf16.msra.mxu0 %v599
    %659 = vmatpush.bf16.msra.mxu0 %v597
    %660 = vmatpush.bf16.msra.mxu0 %v595
    %661 = vmatpush.bf16.msra.mxu0 %v593
    %662 = vmatpush.bf16.msra.mxu0 %v591
    %663 = vmatmul.bf16.gmra.mxu0 %v455
    %v664 = vpop.f32.mrf.mxu0
    %v665 = vadd.f32 %v491, %v664
    %v666 = vpop.f32.mrf.mxu0
    %667 = vdwg.mxu0
    %668 = vmatpush.bf16.msra.mxu0 %v621
    %669 = vmatpush.bf16.msra.mxu0 %v619
    %670 = vmatpush.bf16.msra.mxu0 %v617
    %671 = vmatpush.bf16.msra.mxu0 %v615
    %672 = vmatpush.bf16.msra.mxu0 %v613
    %673 = vmatpush.bf16.msra.mxu0 %v611
    %674 = vmatpush.bf16.msra.mxu0 %v609
    %675 = vmatpush.bf16.msra.mxu0 %v607
    %676 = vmatmul.bf16.gmra.mxu0 %v456
    %v677 = vpop.f32.mrf.mxu0
    %v678 = vadd.f32 %v665, %v677
    %v679 = vpop.f32.mrf.mxu0
    %680 = vdwg.mxu0
    %681 = vmatpush.bf16.msra.mxu0 %v606
    %682 = vmatpush.bf16.msra.mxu0 %v604
    %683 = vmatpush.bf16.msra.mxu0 %v602
    %684 = vmatpush.bf16.msra.mxu0 %v600
    %685 = vmatpush.bf16.msra.mxu0 %v598
    %686 = vmatpush.bf16.msra.mxu0 %v596
    %687 = vmatpush.bf16.msra.mxu0 %v594
    %688 = vmatpush.bf16.msra.mxu0 %v592
    %689 = vmatmul.bf16.gmra.mxu0 %v455
    %v690 = vpop.f32.mrf.mxu0
    %v691 = vadd.f32 %v492, %v690
    %v692 = vpop.f32.mrf.mxu0
    %693 = vdwg.mxu0
    %694 = vmatpush.bf16.msra.mxu0 %v622
    %695 = vmatpush.bf16.msra.mxu0 %v620
    %696 = vmatpush.bf16.msra.mxu0 %v618
    %697 = vmatpush.bf16.msra.mxu0 %v616
    %698 = vmatpush.bf16.msra.mxu0 %v614
    %699 = vmatpush.bf16.msra.mxu0 %v612
    %700 = vmatpush.bf16.msra.mxu0 %v610
    %701 = vmatpush.bf16.msra.mxu0 %v608
    %702 = vmatmul.bf16.gmra.mxu0 %v456
    %v703 = vpop.f32.mrf.mxu0
    %v704 = vadd.f32 %v691, %v703
    %v705 = vpop.f32.mrf.mxu0
    %706 = vdwg.mxu0
    %v707 = vmax.f32 %v678, 0.0
    %v708 = vmax.f32 %v704, 0.0
    %v709 = vpack.c.bf16 %v707, %v707
    %v710 = vpack.c.bf16 %v708, %v708
    %v711 = vld [vmem:[#allocation11] sm:$0xf]
    %v712 = vld [vmem:[#allocation11 + $0x4] sm:$0xf]
    %v713 = vld [vmem:[#allocation11 + $0x8] sm:$0xf]
    %v714 = vld [vmem:[#allocation11 + $0xc] sm:$0xf]
    %v715 = vld [vmem:[#allocation11 + $0x10] sm:$0xf]
    %v716 = vld [vmem:[#allocation11 + $0x14] sm:$0xf]
    %v717 = vld [vmem:[#allocation11 + $0x18] sm:$0xf]
    %v718 = vld [vmem:[#allocation11 + $0x1c] sm:$0xf]
    %v719 = vld [vmem:[#allocation11 + $0x20] sm:$0xf]
    %v720 = vld [vmem:[#allocation11 + $0x24] sm:$0xf]
    %v721 = vld [vmem:[#allocation11 + $0x28] sm:$0xf]
    %v722 = vld [vmem:[#allocation11 + $0x2c] sm:$0xf]
    %v723 = vld [vmem:[#allocation11 + $0x30] sm:$0xf]
    %v724 = vld [vmem:[#allocation11 + $0x34] sm:$0xf]
    %v725 = vld [vmem:[#allocation11 + $0x38] sm:$0xf]
    %v726 = vld [vmem:[#allocation11 + $0x3c] sm:$0xf]
    %v727 = vld [vmem:[#allocation11 + $0x40] sm:$0xf]
    %v728 = vld [vmem:[#allocation11 + $0x44] sm:$0xf]
    %v729 = vld [vmem:[#allocation11 + $0x48] sm:$0xf]
    %v730 = vld [vmem:[#allocation11 + $0x4c] sm:$0xf]
    %v731 = vld [vmem:[#allocation11 + $0x50] sm:$0xf]
    %v732 = vld [vmem:[#allocation11 + $0x54] sm:$0xf]
    %v733 = vld [vmem:[#allocation11 + $0x58] sm:$0xf]
    %v734 = vld [vmem:[#allocation11 + $0x5c] sm:$0xf]
    %v735 = vld [vmem:[#allocation11 + $0x60] sm:$0xf]
    %v736 = vld [vmem:[#allocation11 + $0x64] sm:$0xf]
    %v737 = vld [vmem:[#allocation11 + $0x68] sm:$0xf]
    %v738 = vld [vmem:[#allocation11 + $0x6c] sm:$0xf]
    %v739 = vld [vmem:[#allocation11 + $0x70] sm:$0xf]
    %v740 = vld [vmem:[#allocation11 + $0x74] sm:$0xf]
    %v741 = vld [vmem:[#allocation11 + $0x78] sm:$0xf]
    %v742 = vld [vmem:[#allocation11 + $0x7c] sm:$0xf]
    %v743 = vld [vmem:[%s9] sm:$0x1]
    %v745 = vperm.slane %v743, 0
    %v779 = vunpack.c.l.b16 %v711
    %v780 = vunpack.c.l.b16 %v712
    %v781 = vunpack.c.l.b16 %v713
    %v782 = vunpack.c.l.b16 %v714
    %v783 = vunpack.c.l.b16 %v715
    %v784 = vunpack.c.l.b16 %v716
    %v785 = vunpack.c.l.b16 %v717
    %v786 = vunpack.c.l.b16 %v718
    %v787 = vunpack.c.l.b16 %v719
    %v788 = vunpack.c.l.b16 %v720
    %v789 = vunpack.c.l.b16 %v721
    %v790 = vunpack.c.l.b16 %v722
    %v791 = vunpack.c.l.b16 %v723
    %v792 = vunpack.c.l.b16 %v724
    %v793 = vunpack.c.l.b16 %v725
    %v794 = vunpack.c.l.b16 %v726
    %v795 = vunpack.c.l.b16 %v727
    %v796 = vunpack.c.l.b16 %v728
    %v797 = vunpack.c.l.b16 %v729
    %v798 = vunpack.c.l.b16 %v730
    %v799 = vunpack.c.l.b16 %v731
    %v800 = vunpack.c.l.b16 %v732
    %v801 = vunpack.c.l.b16 %v733
    %v802 = vunpack.c.l.b16 %v734
    %v803 = vunpack.c.l.b16 %v735
    %v804 = vunpack.c.l.b16 %v736
    %v805 = vunpack.c.l.b16 %v737
    %v806 = vunpack.c.l.b16 %v738
    %v807 = vunpack.c.l.b16 %v739
    %v808 = vunpack.c.l.b16 %v740
    %v809 = vunpack.c.l.b16 %v741
    %v810 = vunpack.c.l.b16 %v742
    %v811 = vpack.c.b16 %v780, %v779
    %v812 = vpack.c.b16 %v782, %v781
    %v813 = vpack.c.b16 %v784, %v783
    %v814 = vpack.c.b16 %v786, %v785
    %v815 = vpack.c.b16 %v788, %v787
    %v816 = vpack.c.b16 %v790, %v789
    %v817 = vpack.c.b16 %v792, %v791
    %v818 = vpack.c.b16 %v794, %v793
    %v819 = vpack.c.b16 %v796, %v795
    %v820 = vpack.c.b16 %v798, %v797
    %v821 = vpack.c.b16 %v800, %v799
    %v822 = vpack.c.b16 %v802, %v801
    %v823 = vpack.c.b16 %v804, %v803
    %v824 = vpack.c.b16 %v806, %v805
    %v825 = vpack.c.b16 %v808, %v807
    %v826 = vpack.c.b16 %v810, %v809
    %843 = vmatpush.bf16.msra.mxu0 %v818
    %844 = vmatpush.bf16.msra.mxu0 %v817
    %845 = vmatpush.bf16.msra.mxu0 %v816
    %846 = vmatpush.bf16.msra.mxu0 %v815
    %847 = vmatpush.bf16.msra.mxu0 %v814
    %848 = vmatpush.bf16.msra.mxu0 %v813
    %849 = vmatpush.bf16.msra.mxu0 %v812
    %850 = vmatpush.bf16.msra.mxu0 %v811
    %851 = vmatmul.bf16.gmra.mxu0 %v709
    %v852 = vpop.f32.mrf.mxu0
    %v853 = vadd.f32 %v745, %v852
    %v854 = vpop.f32.mrf.mxu0
    %855 = vdwg.mxu0
    %856 = vmatpush.bf16.msra.mxu0 %v826
    %857 = vmatpush.bf16.msra.mxu0 %v825
    %858 = vmatpush.bf16.msra.mxu0 %v824
    %859 = vmatpush.bf16.msra.mxu0 %v823
    %860 = vmatpush.bf16.msra.mxu0 %v822
    %861 = vmatpush.bf16.msra.mxu0 %v821
    %862 = vmatpush.bf16.msra.mxu0 %v820
    %863 = vmatpush.bf16.msra.mxu0 %v819
    %864 = vmatmul.bf16.gmra.mxu0 %v710
    %v865 = vpop.f32.mrf.mxu0
    %v866 = vadd.f32 %v853, %v865
    %v867 = vpop.f32.mrf.mxu0
    %868 = vdwg.mxu0
    %v869 = vtanh.pop %v866
    %v870 = vmul.f32 %v869, 2.0
    %vm871 = vcmask 25600
    %872 = vst.msk [vmem:[#allocation13] sm:$0x3] %vm871, %v870
    // Predicated region
    $region66: #{tpu_custom_call.1} parent=1 // pred_check
      _
    $region67: #{tpu_custom_call.1} parent=1 // pred_check_branch
      %874 = sbr.rel (0) target = $region69
    $region68: #{tpu_custom_call.1} parent=1 // pred_region
      %876 = vsyncadd [#allocation4], 0
      %s878 = sshll.u32 [#allocation13], 4
      %s879 = int_to_ptr.vmem [resolvable:$true] %s878
      %s880 = sshll.u32 %s10, 4
      %s881 = int_to_ptr.hbm [resolvable:$true] %s880
      %883 = dma.vmem_to_hbm [thread:$0]  %s879, 32, %s881, [#allocation4]
    $region69: #{tpu_custom_call.1} parent=1 // pred_fallthru
      _
    // Predicated region
    $region70: #{tpu_custom_call.1} parent=1 // pred_check
      _
    $region71: #{tpu_custom_call.1} parent=1 // pred_check_branch
      %885 = sbr.rel (0) target = $region73
    $region72: #{tpu_custom_call.1} parent=1 // pred_region
      %887 = dma.done [#allocation4], 32
    $region73: #{tpu_custom_call.1} parent=1 // pred_fallthru
      _
    %888 = vsyncpa [#allocation3], 1
    %889 = vsyncpa [#allocation6], 1
    %890 = vsyncpa [#allocation9], 1
    %891 = vsyncpa [#allocation12], 1
    %892 = vsyncpa [#allocation4], 1

// kernel: tpu_custom_call.1
$region0: #{tpu_custom_call.1}
  #allocation0 [shape = 'u32[]', space=smem, size = 0x4, offset = 0x4, fixed_abs, tag = 'smem constant byte address 0x4 - core index']
  #allocation1 [shape = 'u32[72,128]{1,0:T(1,128)}', space=vmem, size = 0x9000, scoped, tag = 'internal scratch']
  %s0 = inlined_call_operand.hbm [shape: bf16[2,16], index: 0, kind: input, shape index: {}]
  %s1 = inlined_call_operand.hbm [shape: bf16[2,8], index: 1, kind: input, shape index: {}]
  %s2 = inlined_call_operand.hbm [shape: bf16[24,256], index: 2, kind: input, shape index: {}]
  %s3 = inlined_call_operand.vmem [shape: f32[1,256], index: 3, kind: input, shape index: {}]
  %s4 = inlined_call_operand.hbm [shape: bf16[256,256], index: 4, kind: input, shape index: {}]
  %s5 = inlined_call_operand.vmem [shape: f32[1,256], index: 5, kind: input, shape index: {}]
  %s6 = inlined_call_operand.hbm [shape: bf16[256,256], index: 6, kind: input, shape index: {}]
  %s7 = inlined_call_operand.vmem [shape: f32[1,256], index: 7, kind: input, shape index: {}]
  %s8 = inlined_call_operand.hbm [shape: bf16[256,128], index: 8, kind: input, shape index: {}]
  %s9 = inlined_call_operand.vmem [shape: f32[1,128], index: 9, kind: input, shape index: {}]
  %s10 = inlined_call_operand.hbm [shape: f32[2,4], index: 10, kind: output, shape index: {}]
  %s11 = sld [smem:[#allocation0]]
  $region74: #{tpu_custom_call.1} parent=0
    _
  %s13 = ssub.s32 1, %s11
  %s14 = scalar_select 0, %s13, %s11
  $region1: #{tpu_custom_call.1} parent=0
    #allocation2 [shape = 'u8[512]{0}', space=vmem, size = 0x400, scoped, tag = 'input window, operand 0, single buffered']
    #allocation3 [shape = 's32[1]{0}', space=sflag, size = 0x4, scoped, tag = 'scoped memory for tpu_custom_call.1']
    #allocation4 [shape = 's32[1]{0}', space=sflag, size = 0x4, scoped, tag = 'scoped memory for tpu_custom_call.1']
    #allocation5 [shape = 'u8[512]{0}', space=vmem, size = 0x400, scoped, tag = 'input window, operand 1, single buffered']
    #allocation6 [shape = 's32[1]{0}', space=sflag, size = 0x4, scoped, tag = 'scoped memory for tpu_custom_call.1']
    #allocation7 [shape = 'u8[12288]{0}', space=vmem, size = 0x3000, scoped, tag = 'input window, operand 2, single buffered']
    #allocation8 [shape = 'u8[131072]{0}', space=vmem, size = 0x20000, scoped, tag = 'input window, operand 4, single buffered']
    #allocation9 [shape = 's32[1]{0}', space=sflag, size = 0x4, scoped, tag = 'scoped memory for tpu_custom_call.1']
    #allocation10 [shape = 'u8[131072]{0}', space=vmem, size = 0x20000, scoped, tag = 'input window, operand 6, single buffered']
    #allocation11 [shape = 'u8[65536]{0}', space=vmem, size = 0x10000, scoped, tag = 'input window, operand 8, single buffered']
    #allocation12 [shape = 's32[1]{0}', space=sflag, size = 0x4, scoped, tag = 'scoped memory for tpu_custom_call.1']
    #allocation13 [shape = 'u8[1024]{0}', space=vmem, size = 0x400, scoped, tag = 'output window, operand 0, single buffered']
    %15 = vsyncpa [#allocation3], 0
    %16 = vsyncpa [#allocation6], 0
    %17 = vsyncpa [#allocation9], 0
    %18 = vsyncpa [#allocation12], 0
    %19 = vsyncpa [#allocation4], 0
    // Predicated region
    $region2: #{tpu_custom_call.1} parent=1 // pred_check
      _
    $region3: #{tpu_custom_call.1} parent=1 // pred_check_branch
      %21 = sbr.rel (0) target = $region5
    $region4: #{tpu_custom_call.1} parent=1 // pred_region
      %23 = vsyncadd [#allocation3], 0
      %s25 = sshll.u32 %s0, 4
      %s26 = int_to_ptr.hbm [resolvable:$true] %s25
      %s27 = sshll.u32 [#allocation2], 4
      %s28 = int_to_ptr.vmem [resolvable:$true] %s27
      %30 = dma.hbm_to_vmem [thread:$0]  %s26, 16, %s28, [#allocation3]
    $region5: #{tpu_custom_call.1} parent=1 // pred_fallthru
      _
    // Predicated region
    $region6: #{tpu_custom_call.1} parent=1 // pred_check
      _
    $region7: #{tpu_custom_call.1} parent=1 // pred_check_branch
      %32 = sbr.rel (0) target = $region9
    $region8: #{tpu_custom_call.1} parent=1 // pred_region
      %34 = vsyncadd [#allocation6], 0
      %s36 = sshll.u32 %s1, 4
      %s37 = int_to_ptr.hbm [resolvable:$true] %s36
      %s38 = sshll.u32 [#allocation5], 4
      %s39 = int_to_ptr.vmem [resolvable:$true] %s38
      %41 = dma.hbm_to_vmem [thread:$0]  %s37, 16, %s39, [#allocation6]
    $region9: #{tpu_custom_call.1} parent=1 // pred_fallthru
      _
    // Predicated region
    $region10: #{tpu_custom_call.1} parent=1 // pred_check
      _
    $region11: #{tpu_custom_call.1} parent=1 // pred_check_branch
      %43 = sbr.rel (0) target = $region13
    $region12: #{tpu_custom_call.1} parent=1 // pred_region
      %45 = vsyncadd [#allocation6], 0
      %s46 = sshll.u32 %s2, 4
      %s47 = int_to_ptr.hbm [resolvable:$true] %s46
      %s48 = sshll.u32 [#allocation7], 4
      %s49 = int_to_ptr.vmem [resolvable:$true] %s48
      %54 = dma.hbm_to_vmem [thread:$0]  %s47, 384, %s49, [#allocation6], 128, 128, 8
    $region13: #{tpu_custom_call.1} parent=1 // pred_fallthru
      _
    // Predicated region
    $region14: #{tpu_custom_call.1} parent=1 // pred_check
      _
    $region15: #{tpu_custom_call.1} parent=1 // pred_check_branch
      %56 = sbr.rel (0) target = $region17
    $region16: #{tpu_custom_call.1} parent=1 // pred_region
      _
    $region17: #{tpu_custom_call.1} parent=1 // pred_fallthru
      _
    // Predicated region
    $region18: #{tpu_custom_call.1} parent=1 // pred_check
      _
    $region19: #{tpu_custom_call.1} parent=1 // pred_check_branch
      %58 = sbr.rel (0) target = $region21
    $region20: #{tpu_custom_call.1} parent=1 // pred_region
      %60 = vsyncadd [#allocation9], 0
      %s61 = sshll.u32 %s4, 4
      %s62 = int_to_ptr.hbm [resolvable:$true] %s61
      %s63 = sshll.u32 [#allocation8], 4
      %s64 = int_to_ptr.vmem [resolvable:$true] %s63
      %69 = dma.hbm_to_vmem [thread:$0]  %s62, 4096, %s64, [#allocation9], 128, 128, 8
    $region21: #{tpu_custom_call.1} parent=1 // pred_fallthru
      _
    // Predicated region
    $region22: #{tpu_custom_call.1} parent=1 // pred_check
      _
    $region23: #{tpu_custom_call.1} parent=1 // pred_check_branch
      %71 = sbr.rel (0) target = $region25
    $region24: #{tpu_custom_call.1} parent=1 // pred_region
      _
    $region25: #{tpu_custom_call.1} parent=1 // pred_fallthru
      _
    // Predicated region
    $region26: #{tpu_custom_call.1} parent=1 // pred_check
      _
    $region27: #{tpu_custom_call.1} parent=1 // pred_check_branch
      %73 = sbr.rel (0) target = $region29
    $region28: #{tpu_custom_call.1} parent=1 // pred_region
      %75 = vsyncadd [#allocation9], 0
      %s76 = sshll.u32 %s6, 4
      %s77 = int_to_ptr.hbm [resolvable:$true] %s76
      %s78 = sshll.u32 [#allocation10], 4
      %s79 = int_to_ptr.vmem [resolvable:$true] %s78
      %84 = dma.hbm_to_vmem [thread:$0]  %s77, 4096, %s79, [#allocation9], 128, 128, 8
    $region29: #{tpu_custom_call.1} parent=1 // pred_fallthru
      _
    // Predicated region
    $region30: #{tpu_custom_call.1} parent=1 // pred_check
      _
    $region31: #{tpu_custom_call.1} parent=1 // pred_check_branch
      %86 = sbr.rel (0) target = $region33
    $region32: #{tpu_custom_call.1} parent=1 // pred_region
      _
    $region33: #{tpu_custom_call.1} parent=1 // pred_fallthru
      _
    // Predicated region
    $region34: #{tpu_custom_call.1} parent=1 // pred_check
      _
    $region35: #{tpu_custom_call.1} parent=1 // pred_check_branch
      %88 = sbr.rel (0) target = $region37
    $region36: #{tpu_custom_call.1} parent=1 // pred_region
      %90 = vsyncadd [#allocation12], 0
      %s91 = sshll.u32 %s8, 4
      %s92 = int_to_ptr.hbm [resolvable:$true] %s91
      %s93 = sshll.u32 [#allocation11], 4
      %s94 = int_to_ptr.vmem [resolvable:$true] %s93
      %99 = dma.hbm_to_vmem [thread:$0]  %s92, 2048, %s94, [#allocation12], 64, 64, 4
    $region37: #{tpu_custom_call.1} parent=1 // pred_fallthru
      _
    // Predicated region
    $region38: #{tpu_custom_call.1} parent=1 // pred_check
      _
    $region39: #{tpu_custom_call.1} parent=1 // pred_check_branch
      %101 = sbr.rel (0) target = $region41
    $region40: #{tpu_custom_call.1} parent=1 // pred_region
      _
    $region41: #{tpu_custom_call.1} parent=1 // pred_fallthru
      _
    // Predicated region
    $region42: #{tpu_custom_call.1} parent=1 // pred_check
      _
    $region43: #{tpu_custom_call.1} parent=1 // pred_check_branch
      %103 = sbr.rel (0) target = $region45
    $region44: #{tpu_custom_call.1} parent=1 // pred_region
      %105 = dma.done [#allocation3], 16
    $region45: #{tpu_custom_call.1} parent=1 // pred_fallthru
      _
    // Predicated region
    $region46: #{tpu_custom_call.1} parent=1 // pred_check
      _
    $region47: #{tpu_custom_call.1} parent=1 // pred_check_branch
      %107 = sbr.rel (0) target = $region49
    $region48: #{tpu_custom_call.1} parent=1 // pred_region
      %109 = dma.done [#allocation6], 16
    $region49: #{tpu_custom_call.1} parent=1 // pred_fallthru
      _
    // Predicated region
    $region50: #{tpu_custom_call.1} parent=1 // pred_check
      _
    $region51: #{tpu_custom_call.1} parent=1 // pred_check_branch
      %111 = sbr.rel (0) target = $region53
    $region52: #{tpu_custom_call.1} parent=1 // pred_region
      %113 = dma.done [#allocation6], 384
    $region53: #{tpu_custom_call.1} parent=1 // pred_fallthru
      _
    // Predicated region
    $region54: #{tpu_custom_call.1} parent=1 // pred_check
      _
    $region55: #{tpu_custom_call.1} parent=1 // pred_check_branch
      %115 = sbr.rel (0) target = $region57
    $region56: #{tpu_custom_call.1} parent=1 // pred_region
      %117 = dma.done [#allocation9], 4096
    $region57: #{tpu_custom_call.1} parent=1 // pred_fallthru
      _
    // Predicated region
    $region58: #{tpu_custom_call.1} parent=1 // pred_check
      _
    $region59: #{tpu_custom_call.1} parent=1 // pred_check_branch
      %119 = sbr.rel (0) target = $region61
    $region60: #{tpu_custom_call.1} parent=1 // pred_region
      %121 = dma.done [#allocation9], 4096
    $region61: #{tpu_custom_call.1} parent=1 // pred_fallthru
      _
    // Predicated region
    $region62: #{tpu_custom_call.1} parent=1 // pred_check
      _
    $region63: #{tpu_custom_call.1} parent=1 // pred_check_branch
      %123 = sbr.rel (0) target = $region65
    $region64: #{tpu_custom_call.1} parent=1 // pred_region
      %125 = dma.done [#allocation12], 2048
    $region65: #{tpu_custom_call.1} parent=1 // pred_fallthru
      _
    %v127 = vld [vmem:[#allocation2] sm:$0x1]
    %v128 = vld [vmem:[#allocation7] sm:$0xff]
    %v129 = vld [vmem:[#allocation7 + $0x8] sm:$0xff]
    %v130 = vld [vmem:[#allocation5] sm:$0x1]
    %v131 = vld [vmem:[#allocation7 + $0x10] sm:$0xff]
    %v133 = vunpack.c.l.b16 %v131
    %v134 = vunpack.c.h.b16 %v131
    %v135 = vpack.c.b16 %v133, %v133
    %v136 = vpack.c.b16 %v134, %v134
    %vm137 = vcmask 64512
    %v139 = vsel %vm137, %v130, 0
    %vm141 = vcmask 1043456
    %v143 = vsel %vm141, %v135, 0
    %v146 = vsel %vm141, %v136, 0
    %148 = vmatpush.bf16.msra.mxu0 0
    %149 = vmatpush.bf16.msra.mxu0 0
    %150 = vmatpush.bf16.msra.mxu0 0
    %151 = vmatpush.bf16.msra.mxu0 0
    %152 = vmatpush.bf16.msra.mxu0 0
    %153 = vmatpush.bf16.msra.mxu0 0
    %154 = vmatpush.bf16.msra.mxu0 0
    %155 = vmatpush.bf16.msra.mxu0 %v143
    %156 = vmatmul.bf16.gmra.mxu0 %v139
    %v157 = vpop.f32.mrf.mxu0
    %v158 = vadd.f32 0.0, %v157
    %v159 = vpop.f32.mrf.mxu0
    %160 = vdwg.mxu0
    %161 = vmatpush.bf16.msra.mxu0 0
    %162 = vmatpush.bf16.msra.mxu0 0
    %163 = vmatpush.bf16.msra.mxu0 0
    %164 = vmatpush.bf16.msra.mxu0 0
    %165 = vmatpush.bf16.msra.mxu0 0
    %166 = vmatpush.bf16.msra.mxu0 0
    %167 = vmatpush.bf16.msra.mxu0 0
    %168 = vmatpush.bf16.msra.mxu0 %v146
    %169 = vmatmul.bf16.gmra.mxu0 %v139
    %v170 = vpop.f32.mrf.mxu0
    %v171 = vadd.f32 0.0, %v170
    %v172 = vpop.f32.mrf.mxu0
    %173 = vdwg.mxu0
    %v176 = vunpack.c.l.b16 %v128
    %v177 = vunpack.c.h.b16 %v128
    %v178 = vunpack.c.l.b16 %v129
    %v179 = vunpack.c.h.b16 %v129
    %v180 = vpack.c.b16 %v178, %v176
    %v181 = vpack.c.b16 %v179, %v177
    %vm184 = vcmask 130048
    %v186 = vsel %vm184, %v127, 0
    %188 = vmatpush.bf16.msra.mxu0 0
    %189 = vmatpush.bf16.msra.mxu0 0
    %190 = vmatpush.bf16.msra.mxu0 0
    %191 = vmatpush.bf16.msra.mxu0 0
    %192 = vmatpush.bf16.msra.mxu0 0
    %193 = vmatpush.bf16.msra.mxu0 0
    %194 = vmatpush.bf16.msra.mxu0 0
    %195 = vmatpush.bf16.msra.mxu0 %v180
    %196 = vmatmul.bf16.gmra.mxu0 %v186
    %v197 = vpop.f32.mrf.mxu0
    %v198 = vadd.f32 %v158, %v197
    %v199 = vpop.f32.mrf.mxu0
    %200 = vdwg.mxu0
    %201 = vmatpush.bf16.msra.mxu0 0
    %202 = vmatpush.bf16.msra.mxu0 0
    %203 = vmatpush.bf16.msra.mxu0 0
    %204 = vmatpush.bf16.msra.mxu0 0
    %205 = vmatpush.bf16.msra.mxu0 0
    %206 = vmatpush.bf16.msra.mxu0 0
    %207 = vmatpush.bf16.msra.mxu0 0
    %208 = vmatpush.bf16.msra.mxu0 %v181
    %209 = vmatmul.bf16.gmra.mxu0 %v186
    %v210 = vpop.f32.mrf.mxu0
    %v211 = vadd.f32 %v171, %v210
    %v212 = vpop.f32.mrf.mxu0
    %213 = vdwg.mxu0
    %v214 = vld [vmem:[%s3] sm:$0x3]
    %v216 = vperm.slane %v214, 0
    %v217 = vperm.slane %v214, 1
    %v220 = vadd.f32 %v198, %v216
    %v221 = vadd.f32 %v211, %v217
    %v222 = vmax.f32 %v220, 0.0
    %v223 = vmax.f32 %v221, 0.0
    %v224 = vpack.c.bf16 %v222, %v222
    %v225 = vpack.c.bf16 %v223, %v223
    %v226 = vld [vmem:[#allocation8] sm:$0xff]
    %v227 = vld [vmem:[#allocation8 + $0x8] sm:$0xff]
    %v228 = vld [vmem:[#allocation8 + $0x10] sm:$0xff]
    %v229 = vld [vmem:[#allocation8 + $0x18] sm:$0xff]
    %v230 = vld [vmem:[#allocation8 + $0x20] sm:$0xff]
    %v231 = vld [vmem:[#allocation8 + $0x28] sm:$0xff]
    %v232 = vld [vmem:[#allocation8 + $0x30] sm:$0xff]
    %v233 = vld [vmem:[#allocation8 + $0x38] sm:$0xff]
    %v234 = vld [vmem:[#allocation8 + $0x40] sm:$0xff]
    %v235 = vld [vmem:[#allocation8 + $0x48] sm:$0xff]
    %v236 = vld [vmem:[#allocation8 + $0x50] sm:$0xff]
    %v237 = vld [vmem:[#allocation8 + $0x58] sm:$0xff]
    %v238 = vld [vmem:[#allocation8 + $0x60] sm:$0xff]
    %v239 = vld [vmem:[#allocation8 + $0x68] sm:$0xff]
    %v240 = vld [vmem:[#allocation8 + $0x70] sm:$0xff]
    %v241 = vld [vmem:[#allocation8 + $0x78] sm:$0xff]
    %v242 = vld [vmem:[#allocation8 + $0x80] sm:$0xff]
    %v243 = vld [vmem:[#allocation8 + $0x88] sm:$0xff]
    %v244 = vld [vmem:[#allocation8 + $0x90] sm:$0xff]
    %v245 = vld [vmem:[#allocation8 + $0x98] sm:$0xff]
    %v246 = vld [vmem:[#allocation8 + $0xa0] sm:$0xff]
    %v247 = vld [vmem:[#allocation8 + $0xa8] sm:$0xff]
    %v248 = vld [vmem:[#allocation8 + $0xb0] sm:$0xff]
    %v249 = vld [vmem:[#allocation8 + $0xb8] sm:$0xff]
    %v250 = vld [vmem:[#allocation8 + $0xc0] sm:$0xff]
    %v251 = vld [vmem:[#allocation8 + $0xc8] sm:$0xff]
    %v252 = vld [vmem:[#allocation8 + $0xd0] sm:$0xff]
    %v253 = vld [vmem:[#allocation8 + $0xd8] sm:$0xff]
    %v254 = vld [vmem:[#allocation8 + $0xe0] sm:$0xff]
    %v255 = vld [vmem:[#allocation8 + $0xe8] sm:$0xff]
    %v256 = vld [vmem:[#allocation8 + $0xf0] sm:$0xff]
    %v257 = vld [vmem:[#allocation8 + $0xf8] sm:$0xff]
    %v258 = vld [vmem:[%s5] sm:$0x3]
    %v260 = vperm.slane %v258, 0
    %v261 = vperm.slane %v258, 1
    %v296 = vunpack.c.l.b16 %v226
    %v297 = vunpack.c.h.b16 %v226
    %v298 = vunpack.c.l.b16 %v227
    %v299 = vunpack.c.h.b16 %v227
    %v300 = vunpack.c.l.b16 %v228
    %v301 = vunpack.c.h.b16 %v228
    %v302 = vunpack.c.l.b16 %v229
    %v303 = vunpack.c.h.b16 %v229
    %v304 = vunpack.c.l.b16 %v230
    %v305 = vunpack.c.h.b16 %v230
    %v306 = vunpack.c.l.b16 %v231
    %v307 = vunpack.c.h.b16 %v231
    %v308 = vunpack.c.l.b16 %v232
    %v309 = vunpack.c.h.b16 %v232
    %v310 = vunpack.c.l.b16 %v233
    %v311 = vunpack.c.h.b16 %v233
    %v312 = vunpack.c.l.b16 %v234
    %v313 = vunpack.c.h.b16 %v234
    %v314 = vunpack.c.l.b16 %v235
    %v315 = vunpack.c.h.b16 %v235
    %v316 = vunpack.c.l.b16 %v236
    %v317 = vunpack.c.h.b16 %v236
    %v318 = vunpack.c.l.b16 %v237
    %v319 = vunpack.c.h.b16 %v237
    %v320 = vunpack.c.l.b16 %v238
    %v321 = vunpack.c.h.b16 %v238
    %v322 = vunpack.c.l.b16 %v239
    %v323 = vunpack.c.h.b16 %v239
    %v324 = vunpack.c.l.b16 %v240
    %v325 = vunpack.c.h.b16 %v240
    %v326 = vunpack.c.l.b16 %v241
    %v327 = vunpack.c.h.b16 %v241
    %v328 = vunpack.c.l.b16 %v242
    %v329 = vunpack.c.h.b16 %v242
    %v330 = vunpack.c.l.b16 %v243
    %v331 = vunpack.c.h.b16 %v243
    %v332 = vunpack.c.l.b16 %v244
    %v333 = vunpack.c.h.b16 %v244
    %v334 = vunpack.c.l.b16 %v245
    %v335 = vunpack.c.h.b16 %v245
    %v336 = vunpack.c.l.b16 %v246
    %v337 = vunpack.c.h.b16 %v246
    %v338 = vunpack.c.l.b16 %v247
    %v339 = vunpack.c.h.b16 %v247
    %v340 = vunpack.c.l.b16 %v248
    %v341 = vunpack.c.h.b16 %v248
    %v342 = vunpack.c.l.b16 %v249
    %v343 = vunpack.c.h.b16 %v249
    %v344 = vunpack.c.l.b16 %v250
    %v345 = vunpack.c.h.b16 %v250
    %v346 = vunpack.c.l.b16 %v251
    %v347 = vunpack.c.h.b16 %v251
    %v348 = vunpack.c.l.b16 %v252
    %v349 = vunpack.c.h.b16 %v252
    %v350 = vunpack.c.l.b16 %v253
    %v351 = vunpack.c.h.b16 %v253
    %v352 = vunpack.c.l.b16 %v254
    %v353 = vunpack.c.h.b16 %v254
    %v354 = vunpack.c.l.b16 %v255
    %v355 = vunpack.c.h.b16 %v255
    %v356 = vunpack.c.l.b16 %v256
    %v357 = vunpack.c.h.b16 %v256
    %v358 = vunpack.c.l.b16 %v257
    %v359 = vunpack.c.h.b16 %v257
    %v360 = vpack.c.b16 %v298, %v296
    %v361 = vpack.c.b16 %v299, %v297
    %v362 = vpack.c.b16 %v302, %v300
    %v363 = vpack.c.b16 %v303, %v301
    %v364 = vpack.c.b16 %v306, %v304
    %v365 = vpack.c.b16 %v307, %v305
    %v366 = vpack.c.b16 %v310, %v308
    %v367 = vpack.c.b16 %v311, %v309
    %v368 = vpack.c.b16 %v314, %v312
    %v369 = vpack.c.b16 %v315, %v313
    %v370 = vpack.c.b16 %v318, %v316
    %v371 = vpack.c.b16 %v319, %v317
    %v372 = vpack.c.b16 %v322, %v320
    %v373 = vpack.c.b16 %v323, %v321
    %v374 = vpack.c.b16 %v326, %v324
    %v375 = vpack.c.b16 %v327, %v325
    %v376 = vpack.c.b16 %v330, %v328
    %v377 = vpack.c.b16 %v331, %v329
    %v378 = vpack.c.b16 %v334, %v332
    %v379 = vpack.c.b16 %v335, %v333
    %v380 = vpack.c.b16 %v338, %v336
    %v381 = vpack.c.b16 %v339, %v337
    %v382 = vpack.c.b16 %v342, %v340
    %v383 = vpack.c.b16 %v343, %v341
    %v384 = vpack.c.b16 %v346, %v344
    %v385 = vpack.c.b16 %v347, %v345
    %v386 = vpack.c.b16 %v350, %v348
    %v387 = vpack.c.b16 %v351, %v349
    %v388 = vpack.c.b16 %v354, %v352
    %v389 = vpack.c.b16 %v355, %v353
    %v390 = vpack.c.b16 %v358, %v356
    %v391 = vpack.c.b16 %v359, %v357
    %424 = vmatpush.bf16.msra.mxu0 %v374
    %425 = vmatpush.bf16.msra.mxu0 %v372
    %426 = vmatpush.bf16.msra.mxu0 %v370
    %427 = vmatpush.bf16.msra.mxu0 %v368
    %428 = vmatpush.bf16.msra.mxu0 %v366
    %429 = vmatpush.bf16.msra.mxu0 %v364
    %430 = vmatpush.bf16.msra.mxu0 %v362
    %431 = vmatpush.bf16.msra.mxu0 %v360
    %432 = vmatmul.bf16.gmra.mxu0 %v224
    %v433 = vpop.f32.mrf.mxu0
    %v434 = vadd.f32 %v260, %v433
    %v435 = vpop.f32.mrf.mxu0
    %436 = vdwg.mxu0
    %437 = vmatpush.bf16.msra.mxu0 %v390
    %438 = vmatpush.bf16.msra.mxu0 %v388
    %439 = vmatpush.bf16.msra.mxu0 %v386
    %440 = vmatpush.bf16.msra.mxu0 %v384
    %441 = vmatpush.bf16.msra.mxu0 %v382
    %442 = vmatpush.bf16.msra.mxu0 %v380
    %443 = vmatpush.bf16.msra.mxu0 %v378
    %444 = vmatpush.bf16.msra.mxu0 %v376
    %445 = vmatmul.bf16.gmra.mxu0 %v225
    %v446 = vpop.f32.mrf.mxu0
    %v447 = vadd.f32 %v434, %v446
    %v448 = vpop.f32.mrf.mxu0
    %449 = vdwg.mxu0
    %450 = vmatpush.bf16.msra.mxu0 %v375
    %451 = vmatpush.bf16.msra.mxu0 %v373
    %452 = vmatpush.bf16.msra.mxu0 %v371
    %453 = vmatpush.bf16.msra.mxu0 %v369
    %454 = vmatpush.bf16.msra.mxu0 %v367
    %455 = vmatpush.bf16.msra.mxu0 %v365
    %456 = vmatpush.bf16.msra.mxu0 %v363
    %457 = vmatpush.bf16.msra.mxu0 %v361
    %458 = vmatmul.bf16.gmra.mxu0 %v224
    %v459 = vpop.f32.mrf.mxu0
    %v460 = vadd.f32 %v261, %v459
    %v461 = vpop.f32.mrf.mxu0
    %462 = vdwg.mxu0
    %463 = vmatpush.bf16.msra.mxu0 %v391
    %464 = vmatpush.bf16.msra.mxu0 %v389
    %465 = vmatpush.bf16.msra.mxu0 %v387
    %466 = vmatpush.bf16.msra.mxu0 %v385
    %467 = vmatpush.bf16.msra.mxu0 %v383
    %468 = vmatpush.bf16.msra.mxu0 %v381
    %469 = vmatpush.bf16.msra.mxu0 %v379
    %470 = vmatpush.bf16.msra.mxu0 %v377
    %471 = vmatmul.bf16.gmra.mxu0 %v225
    %v472 = vpop.f32.mrf.mxu0
    %v473 = vadd.f32 %v460, %v472
    %v474 = vpop.f32.mrf.mxu0
    %475 = vdwg.mxu0
    %v476 = vmax.f32 %v447, 0.0
    %v477 = vmax.f32 %v473, 0.0
    %v478 = vpack.c.bf16 %v476, %v476
    %v479 = vpack.c.bf16 %v477, %v477
    %v480 = vld [vmem:[#allocation10] sm:$0xff]
    %v481 = vld [vmem:[#allocation10 + $0x8] sm:$0xff]
    %v482 = vld [vmem:[#allocation10 + $0x10] sm:$0xff]
    %v483 = vld [vmem:[#allocation10 + $0x18] sm:$0xff]
    %v484 = vld [vmem:[#allocation10 + $0x20] sm:$0xff]
    %v485 = vld [vmem:[#allocation10 + $0x28] sm:$0xff]
    %v486 = vld [vmem:[#allocation10 + $0x30] sm:$0xff]
    %v487 = vld [vmem:[#allocation10 + $0x38] sm:$0xff]
    %v488 = vld [vmem:[#allocation10 + $0x40] sm:$0xff]
    %v489 = vld [vmem:[#allocation10 + $0x48] sm:$0xff]
    %v490 = vld [vmem:[#allocation10 + $0x50] sm:$0xff]
    %v491 = vld [vmem:[#allocation10 + $0x58] sm:$0xff]
    %v492 = vld [vmem:[#allocation10 + $0x60] sm:$0xff]
    %v493 = vld [vmem:[#allocation10 + $0x68] sm:$0xff]
    %v494 = vld [vmem:[#allocation10 + $0x70] sm:$0xff]
    %v495 = vld [vmem:[#allocation10 + $0x78] sm:$0xff]
    %v496 = vld [vmem:[#allocation10 + $0x80] sm:$0xff]
    %v497 = vld [vmem:[#allocation10 + $0x88] sm:$0xff]
    %v498 = vld [vmem:[#allocation10 + $0x90] sm:$0xff]
    %v499 = vld [vmem:[#allocation10 + $0x98] sm:$0xff]
    %v500 = vld [vmem:[#allocation10 + $0xa0] sm:$0xff]
    %v501 = vld [vmem:[#allocation10 + $0xa8] sm:$0xff]
    %v502 = vld [vmem:[#allocation10 + $0xb0] sm:$0xff]
    %v503 = vld [vmem:[#allocation10 + $0xb8] sm:$0xff]
    %v504 = vld [vmem:[#allocation10 + $0xc0] sm:$0xff]
    %v505 = vld [vmem:[#allocation10 + $0xc8] sm:$0xff]
    %v506 = vld [vmem:[#allocation10 + $0xd0] sm:$0xff]
    %v507 = vld [vmem:[#allocation10 + $0xd8] sm:$0xff]
    %v508 = vld [vmem:[#allocation10 + $0xe0] sm:$0xff]
    %v509 = vld [vmem:[#allocation10 + $0xe8] sm:$0xff]
    %v510 = vld [vmem:[#allocation10 + $0xf0] sm:$0xff]
    %v511 = vld [vmem:[#allocation10 + $0xf8] sm:$0xff]
    %v512 = vld [vmem:[%s7] sm:$0x3]
    %v514 = vperm.slane %v512, 0
    %v515 = vperm.slane %v512, 1
    %v550 = vunpack.c.l.b16 %v480
    %v551 = vunpack.c.h.b16 %v480
    %v552 = vunpack.c.l.b16 %v481
    %v553 = vunpack.c.h.b16 %v481
    %v554 = vunpack.c.l.b16 %v482
    %v555 = vunpack.c.h.b16 %v482
    %v556 = vunpack.c.l.b16 %v483
    %v557 = vunpack.c.h.b16 %v483
    %v558 = vunpack.c.l.b16 %v484
    %v559 = vunpack.c.h.b16 %v484
    %v560 = vunpack.c.l.b16 %v485
    %v561 = vunpack.c.h.b16 %v485
    %v562 = vunpack.c.l.b16 %v486
    %v563 = vunpack.c.h.b16 %v486
    %v564 = vunpack.c.l.b16 %v487
    %v565 = vunpack.c.h.b16 %v487
    %v566 = vunpack.c.l.b16 %v488
    %v567 = vunpack.c.h.b16 %v488
    %v568 = vunpack.c.l.b16 %v489
    %v569 = vunpack.c.h.b16 %v489
    %v570 = vunpack.c.l.b16 %v490
    %v571 = vunpack.c.h.b16 %v490
    %v572 = vunpack.c.l.b16 %v491
    %v573 = vunpack.c.h.b16 %v491
    %v574 = vunpack.c.l.b16 %v492
    %v575 = vunpack.c.h.b16 %v492
    %v576 = vunpack.c.l.b16 %v493
    %v577 = vunpack.c.h.b16 %v493
    %v578 = vunpack.c.l.b16 %v494
    %v579 = vunpack.c.h.b16 %v494
    %v580 = vunpack.c.l.b16 %v495
    %v581 = vunpack.c.h.b16 %v495
    %v582 = vunpack.c.l.b16 %v496
    %v583 = vunpack.c.h.b16 %v496
    %v584 = vunpack.c.l.b16 %v497
    %v585 = vunpack.c.h.b16 %v497
    %v586 = vunpack.c.l.b16 %v498
    %v587 = vunpack.c.h.b16 %v498
    %v588 = vunpack.c.l.b16 %v499
    %v589 = vunpack.c.h.b16 %v499
    %v590 = vunpack.c.l.b16 %v500
    %v591 = vunpack.c.h.b16 %v500
    %v592 = vunpack.c.l.b16 %v501
    %v593 = vunpack.c.h.b16 %v501
    %v594 = vunpack.c.l.b16 %v502
    %v595 = vunpack.c.h.b16 %v502
    %v596 = vunpack.c.l.b16 %v503
    %v597 = vunpack.c.h.b16 %v503
    %v598 = vunpack.c.l.b16 %v504
    %v599 = vunpack.c.h.b16 %v504
    %v600 = vunpack.c.l.b16 %v505
    %v601 = vunpack.c.h.b16 %v505
    %v602 = vunpack.c.l.b16 %v506
    %v603 = vunpack.c.h.b16 %v506
    %v604 = vunpack.c.l.b16 %v507
    %v605 = vunpack.c.h.b16 %v507
    %v606 = vunpack.c.l.b16 %v508
    %v607 = vunpack.c.h.b16 %v508
    %v608 = vunpack.c.l.b16 %v509
    %v609 = vunpack.c.h.b16 %v509
    %v610 = vunpack.c.l.b16 %v510
    %v611 = vunpack.c.h.b16 %v510
    %v612 = vunpack.c.l.b16 %v511
    %v613 = vunpack.c.h.b16 %v511
    %v614 = vpack.c.b16 %v552, %v550
    %v615 = vpack.c.b16 %v553, %v551
    %v616 = vpack.c.b16 %v556, %v554
    %v617 = vpack.c.b16 %v557, %v555
    %v618 = vpack.c.b16 %v560, %v558
    %v619 = vpack.c.b16 %v561, %v559
    %v620 = vpack.c.b16 %v564, %v562
    %v621 = vpack.c.b16 %v565, %v563
    %v622 = vpack.c.b16 %v568, %v566
    %v623 = vpack.c.b16 %v569, %v567
    %v624 = vpack.c.b16 %v572, %v570
    %v625 = vpack.c.b16 %v573, %v571
    %v626 = vpack.c.b16 %v576, %v574
    %v627 = vpack.c.b16 %v577, %v575
    %v628 = vpack.c.b16 %v580, %v578
    %v629 = vpack.c.b16 %v581, %v579
    %v630 = vpack.c.b16 %v584, %v582
    %v631 = vpack.c.b16 %v585, %v583
    %v632 = vpack.c.b16 %v588, %v586
    %v633 = vpack.c.b16 %v589, %v587
    %v634 = vpack.c.b16 %v592, %v590
    %v635 = vpack.c.b16 %v593, %v591
    %v636 = vpack.c.b16 %v596, %v594
    %v637 = vpack.c.b16 %v597, %v595
    %v638 = vpack.c.b16 %v600, %v598
    %v639 = vpack.c.b16 %v601, %v599
    %v640 = vpack.c.b16 %v604, %v602
    %v641 = vpack.c.b16 %v605, %v603
    %v642 = vpack.c.b16 %v608, %v606
    %v643 = vpack.c.b16 %v609, %v607
    %v644 = vpack.c.b16 %v612, %v610
    %v645 = vpack.c.b16 %v613, %v611
    %678 = vmatpush.bf16.msra.mxu0 %v628
    %679 = vmatpush.bf16.msra.mxu0 %v626
    %680 = vmatpush.bf16.msra.mxu0 %v624
    %681 = vmatpush.bf16.msra.mxu0 %v622
    %682 = vmatpush.bf16.msra.mxu0 %v620
    %683 = vmatpush.bf16.msra.mxu0 %v618
    %684 = vmatpush.bf16.msra.mxu0 %v616
    %685 = vmatpush.bf16.msra.mxu0 %v614
    %686 = vmatmul.bf16.gmra.mxu0 %v478
    %v687 = vpop.f32.mrf.mxu0
    %v688 = vadd.f32 %v514, %v687
    %v689 = vpop.f32.mrf.mxu0
    %690 = vdwg.mxu0
    %691 = vmatpush.bf16.msra.mxu0 %v644
    %692 = vmatpush.bf16.msra.mxu0 %v642
    %693 = vmatpush.bf16.msra.mxu0 %v640
    %694 = vmatpush.bf16.msra.mxu0 %v638
    %695 = vmatpush.bf16.msra.mxu0 %v636
    %696 = vmatpush.bf16.msra.mxu0 %v634
    %697 = vmatpush.bf16.msra.mxu0 %v632
    %698 = vmatpush.bf16.msra.mxu0 %v630
    %699 = vmatmul.bf16.gmra.mxu0 %v479
    %v700 = vpop.f32.mrf.mxu0
    %v701 = vadd.f32 %v688, %v700
    %v702 = vpop.f32.mrf.mxu0
    %703 = vdwg.mxu0
    %704 = vmatpush.bf16.msra.mxu0 %v629
    %705 = vmatpush.bf16.msra.mxu0 %v627
    %706 = vmatpush.bf16.msra.mxu0 %v625
    %707 = vmatpush.bf16.msra.mxu0 %v623
    %708 = vmatpush.bf16.msra.mxu0 %v621
    %709 = vmatpush.bf16.msra.mxu0 %v619
    %710 = vmatpush.bf16.msra.mxu0 %v617
    %711 = vmatpush.bf16.msra.mxu0 %v615
    %712 = vmatmul.bf16.gmra.mxu0 %v478
    %v713 = vpop.f32.mrf.mxu0
    %v714 = vadd.f32 %v515, %v713
    %v715 = vpop.f32.mrf.mxu0
    %716 = vdwg.mxu0
    %717 = vmatpush.bf16.msra.mxu0 %v645
    %718 = vmatpush.bf16.msra.mxu0 %v643
    %719 = vmatpush.bf16.msra.mxu0 %v641
    %720 = vmatpush.bf16.msra.mxu0 %v639
    %721 = vmatpush.bf16.msra.mxu0 %v637
    %722 = vmatpush.bf16.msra.mxu0 %v635
    %723 = vmatpush.bf16.msra.mxu0 %v633
    %724 = vmatpush.bf16.msra.mxu0 %v631
    %725 = vmatmul.bf16.gmra.mxu0 %v479
    %v726 = vpop.f32.mrf.mxu0
    %v727 = vadd.f32 %v714, %v726
    %v728 = vpop.f32.mrf.mxu0
    %729 = vdwg.mxu0
    %v730 = vmax.f32 %v701, 0.0
    %v731 = vmax.f32 %v727, 0.0
    %v732 = vpack.c.bf16 %v730, %v730
    %v733 = vpack.c.bf16 %v731, %v731
    %v734 = vld [vmem:[#allocation11] sm:$0xf]
    %v735 = vld [vmem:[#allocation11 + $0x4] sm:$0xf]
    %v736 = vld [vmem:[#allocation11 + $0x8] sm:$0xf]
    %v737 = vld [vmem:[#allocation11 + $0xc] sm:$0xf]
    %v738 = vld [vmem:[#allocation11 + $0x10] sm:$0xf]
    %v739 = vld [vmem:[#allocation11 + $0x14] sm:$0xf]
    %v740 = vld [vmem:[#allocation11 + $0x18] sm:$0xf]
    %v741 = vld [vmem:[#allocation11 + $0x1c] sm:$0xf]
    %v742 = vld [vmem:[#allocation11 + $0x20] sm:$0xf]
    %v743 = vld [vmem:[#allocation11 + $0x24] sm:$0xf]
    %v744 = vld [vmem:[#allocation11 + $0x28] sm:$0xf]
    %v745 = vld [vmem:[#allocation11 + $0x2c] sm:$0xf]
    %v746 = vld [vmem:[#allocation11 + $0x30] sm:$0xf]
    %v747 = vld [vmem:[#allocation11 + $0x34] sm:$0xf]
    %v748 = vld [vmem:[#allocation11 + $0x38] sm:$0xf]
    %v749 = vld [vmem:[#allocation11 + $0x3c] sm:$0xf]
    %v750 = vld [vmem:[#allocation11 + $0x40] sm:$0xf]
    %v751 = vld [vmem:[#allocation11 + $0x44] sm:$0xf]
    %v752 = vld [vmem:[#allocation11 + $0x48] sm:$0xf]
    %v753 = vld [vmem:[#allocation11 + $0x4c] sm:$0xf]
    %v754 = vld [vmem:[#allocation11 + $0x50] sm:$0xf]
    %v755 = vld [vmem:[#allocation11 + $0x54] sm:$0xf]
    %v756 = vld [vmem:[#allocation11 + $0x58] sm:$0xf]
    %v757 = vld [vmem:[#allocation11 + $0x5c] sm:$0xf]
    %v758 = vld [vmem:[#allocation11 + $0x60] sm:$0xf]
    %v759 = vld [vmem:[#allocation11 + $0x64] sm:$0xf]
    %v760 = vld [vmem:[#allocation11 + $0x68] sm:$0xf]
    %v761 = vld [vmem:[#allocation11 + $0x6c] sm:$0xf]
    %v762 = vld [vmem:[#allocation11 + $0x70] sm:$0xf]
    %v763 = vld [vmem:[#allocation11 + $0x74] sm:$0xf]
    %v764 = vld [vmem:[#allocation11 + $0x78] sm:$0xf]
    %v765 = vld [vmem:[#allocation11 + $0x7c] sm:$0xf]
    %v766 = vld [vmem:[%s9] sm:$0x1]
    %v768 = vperm.slane %v766, 0
    %v802 = vunpack.c.l.b16 %v734
    %v803 = vunpack.c.l.b16 %v735
    %v804 = vunpack.c.l.b16 %v736
    %v805 = vunpack.c.l.b16 %v737
    %v806 = vunpack.c.l.b16 %v738
    %v807 = vunpack.c.l.b16 %v739
    %v808 = vunpack.c.l.b16 %v740
    %v809 = vunpack.c.l.b16 %v741
    %v810 = vunpack.c.l.b16 %v742
    %v811 = vunpack.c.l.b16 %v743
    %v812 = vunpack.c.l.b16 %v744
    %v813 = vunpack.c.l.b16 %v745
    %v814 = vunpack.c.l.b16 %v746
    %v815 = vunpack.c.l.b16 %v747
    %v816 = vunpack.c.l.b16 %v748
    %v817 = vunpack.c.l.b16 %v749
    %v818 = vunpack.c.l.b16 %v750
    %v819 = vunpack.c.l.b16 %v751
    %v820 = vunpack.c.l.b16 %v752
    %v821 = vunpack.c.l.b16 %v753
    %v822 = vunpack.c.l.b16 %v754
    %v823 = vunpack.c.l.b16 %v755
    %v824 = vunpack.c.l.b16 %v756
    %v825 = vunpack.c.l.b16 %v757
    %v826 = vunpack.c.l.b16 %v758
    %v827 = vunpack.c.l.b16 %v759
    %v828 = vunpack.c.l.b16 %v760
    %v829 = vunpack.c.l.b16 %v761
    %v830 = vunpack.c.l.b16 %v762
    %v831 = vunpack.c.l.b16 %v763
    %v832 = vunpack.c.l.b16 %v764
    %v833 = vunpack.c.l.b16 %v765
    %v834 = vpack.c.b16 %v803, %v802
    %v835 = vpack.c.b16 %v805, %v804
    %v836 = vpack.c.b16 %v807, %v806
    %v837 = vpack.c.b16 %v809, %v808
    %v838 = vpack.c.b16 %v811, %v810
    %v839 = vpack.c.b16 %v813, %v812
    %v840 = vpack.c.b16 %v815, %v814
    %v841 = vpack.c.b16 %v817, %v816
    %v842 = vpack.c.b16 %v819, %v818
    %v843 = vpack.c.b16 %v821, %v820
    %v844 = vpack.c.b16 %v823, %v822
    %v845 = vpack.c.b16 %v825, %v824
    %v846 = vpack.c.b16 %v827, %v826
    %v847 = vpack.c.b16 %v829, %v828
    %v848 = vpack.c.b16 %v831, %v830
    %v849 = vpack.c.b16 %v833, %v832
    %866 = vmatpush.bf16.msra.mxu0 %v841
    %867 = vmatpush.bf16.msra.mxu0 %v840
    %868 = vmatpush.bf16.msra.mxu0 %v839
    %869 = vmatpush.bf16.msra.mxu0 %v838
    %870 = vmatpush.bf16.msra.mxu0 %v837
    %871 = vmatpush.bf16.msra.mxu0 %v836
    %872 = vmatpush.bf16.msra.mxu0 %v835
    %873 = vmatpush.bf16.msra.mxu0 %v834
    %874 = vmatmul.bf16.gmra.mxu0 %v732
    %v875 = vpop.f32.mrf.mxu0
    %v876 = vadd.f32 %v768, %v875
    %v877 = vpop.f32.mrf.mxu0
    %878 = vdwg.mxu0
    %879 = vmatpush.bf16.msra.mxu0 %v849
    %880 = vmatpush.bf16.msra.mxu0 %v848
    %881 = vmatpush.bf16.msra.mxu0 %v847
    %882 = vmatpush.bf16.msra.mxu0 %v846
    %883 = vmatpush.bf16.msra.mxu0 %v845
    %884 = vmatpush.bf16.msra.mxu0 %v844
    %885 = vmatpush.bf16.msra.mxu0 %v843
    %886 = vmatpush.bf16.msra.mxu0 %v842
    %887 = vmatmul.bf16.gmra.mxu0 %v733
    %v888 = vpop.f32.mrf.mxu0
    %v889 = vadd.f32 %v876, %v888
    %v890 = vpop.f32.mrf.mxu0
    %891 = vdwg.mxu0
    %v892 = vtanh.pop %v889
    %v893 = vmul.f32 %v892, 2.0
    %vm894 = vcmask 25600
    %895 = vst.msk [vmem:[#allocation13] sm:$0x3] %vm894, %v893
    // Predicated region
    $region66: #{tpu_custom_call.1} parent=1 // pred_check
      _
    $region67: #{tpu_custom_call.1} parent=1 // pred_check_branch
      %897 = sbr.rel (0) target = $region69
    $region68: #{tpu_custom_call.1} parent=1 // pred_region
      %899 = vsyncadd [#allocation4], 0
      %s901 = sshll.u32 [#allocation13], 4
      %s902 = int_to_ptr.vmem [resolvable:$true] %s901
      %s903 = sshll.u32 %s10, 4
      %s904 = int_to_ptr.hbm [resolvable:$true] %s903
      %906 = dma.vmem_to_hbm [thread:$0]  %s902, 32, %s904, [#allocation4]
    $region69: #{tpu_custom_call.1} parent=1 // pred_fallthru
      _
    // Predicated region
    $region70: #{tpu_custom_call.1} parent=1 // pred_check
      _
    $region71: #{tpu_custom_call.1} parent=1 // pred_check_branch
      %908 = sbr.rel (0) target = $region73
    $region72: #{tpu_custom_call.1} parent=1 // pred_region
      %910 = dma.done [#allocation4], 32
    $region73: #{tpu_custom_call.1} parent=1 // pred_fallthru
      _
    %911 = vsyncpa [#allocation3], 1
    %912 = vsyncpa [#allocation6], 1
    %913 = vsyncpa [#allocation9], 1
    %914 = vsyncpa [#allocation12], 1
    %915 = vsyncpa [#allocation4], 1

</llo_original>
